<compile_context>
chip_gen: v5e
topology: v5e:2x2
jax: 0.10.0
libtpu: 0.0.40
codegen_flags: <defaults>
</compile_context>

<pallas_src>
import jax
import jax.numpy as jnp
from jax.experimental import pallas as pl
from jax.experimental.pallas import tpu as pltpu

LANES = 128


def _round_up(n, m):
    return ((n + m - 1) // m) * m


def _pick_m_tiling(M, tm_max=512):
    """Choose (Mp, tm) so Mp = ntiles*tm >= M with minimal padding, tm % 8 == 0."""
    Mp8 = _round_up(M, 8)
    if Mp8 <= tm_max:
        return Mp8, Mp8
    ntiles = -(-Mp8 // tm_max)
    tm = _round_up(-(-Mp8 // ntiles), 8)
    return ntiles * tm, tm


# ---------------------------------------------------------------------------
# Pallas kernels
# ---------------------------------------------------------------------------
def _matmul_bias_tanh_kernel(x_ref, w_ref, b_ref, o_ref):
    # bf16 operands -> MXU with f32 accumulation; bias + tanh epilogue in f32.
    acc = jnp.dot(x_ref[...], w_ref[...], preferred_element_type=jnp.float32)
    o_ref[...] = jnp.tanh(acc + b_ref[...]).astype(o_ref.dtype)


def _classifier_kernel(x_ref, w3_ref, b3_ref, w4_ref, b4_ref, w5_ref, b5_ref, o_ref):
    # conv3 (as Linear over the flattened 5x5x16 patch) + tanh + fc1 + tanh + fc2,
    # fully fused: intermediates stay on-chip.
    h = jnp.dot(x_ref[...], w3_ref[...], preferred_element_type=jnp.float32)
    h = jnp.tanh(h + b3_ref[...])
    h = jnp.dot(h.astype(jnp.bfloat16), w4_ref[...], preferred_element_type=jnp.float32)
    h = jnp.tanh(h + b4_ref[...])
    h = jnp.dot(h.astype(jnp.bfloat16), w5_ref[...], preferred_element_type=jnp.float32)
    o_ref[...] = (h + b5_ref[...]).astype(o_ref.dtype)


# ---------------------------------------------------------------------------
# Pallas wrappers
# ---------------------------------------------------------------------------
def matmul_bias_tanh(x_bf16, w_bf16, b_f32, *, tm_max=512):
    """tanh(x @ w + b).  x: (M, K) bf16, w: (K, Np) bf16 with Np % 128 == 0."""
    M, K = x_bf16.shape
    Kw, Np = w_bf16.shape
    assert K == Kw and Np % LANES == 0
    Mp, tm = _pick_m_tiling(M, tm_max)
    if Mp != M:
        x_bf16 = jnp.pad(x_bf16, ((0, Mp - M), (0, 0)))

    out = pl.pallas_call(
        _matmul_bias_tanh_kernel,
        grid=(Mp // tm,),
        in_specs=[
            pl.BlockSpec((tm, K), lambda i: (i, 0)),
            pl.BlockSpec((K, Np), lambda i: (0, 0)),   # weights resident across grid
            pl.BlockSpec((1, Np), lambda i: (0, 0)),
        ],
        out_specs=pl.BlockSpec((tm, Np), lambda i: (i, 0)),
        out_shape=jax.ShapeDtypeStruct((Mp, Np), jnp.float32),
        compiler_params=pltpu.CompilerParams(dimension_semantics=("parallel",)),
    )(x_bf16, w_bf16, b_f32)
    return out[:M]


def classifier(x_bf16, w3, b3, w4, b4, w5, b5):
    """Fused conv3 + tanh + fc1 + tanh + fc2 on the flattened patch."""
    Mp, K = x_bf16.shape
    full2d = lambda shape: pl.BlockSpec(shape, lambda i: (0, 0))
    return pl.pallas_call(
        _classifier_kernel,
        grid=(1,),
        in_specs=[full2d((Mp, K)), full2d(w3.shape), full2d(b3.shape),
                  full2d(w4.shape), full2d(b4.shape), full2d(w5.shape), full2d(b5.shape)],
        out_specs=full2d((Mp, LANES)),
        out_shape=jax.ShapeDtypeStruct((Mp, LANES), jnp.float32),
    )(x_bf16, w3, b3, w4, b4, w5, b5)


# ---------------------------------------------------------------------------
# XLA glue: im2col (patch extraction) in NHWC, K ordered as (kh, kw, c)
# ---------------------------------------------------------------------------
def _im2col_nhwc(x, kh, kw, pad):
    """x: (N, H, W, C) -> patches (N*Ho*Wo, kh*kw*C), stride 1."""
    N, H, W, C = x.shape
    if pad:
        x = jnp.pad(x, ((0, 0), (pad, pad), (pad, pad), (0, 0)))
    Ho = H + 2 * pad - kh + 1
    Wo = W + 2 * pad - kw + 1
    cols = [x[:, i:i + Ho, j:j + Wo, :] for i in range(kh) for j in range(kw)]
    patches = jnp.concatenate(cols, axis=-1)             # (N, Ho, Wo, kh*kw*C)
    return patches.reshape(N * Ho * Wo, kh * kw * C), Ho, Wo


def _avgpool2(x):
    """2x2 stride-2 average pool on NHWC."""
    N, H, W, C = x.shape
    return x.reshape(N, H // 2, 2, W // 2, 2, C).mean(axis=(2, 4))


# ---------------------------------------------------------------------------
# One-time parameter preparation (all padding/reshape/transpose hoisted here)
# ---------------------------------------------------------------------------
def _prep_conv_w(w):
    """Torch conv weight (Cout, Cin, kh, kw) -> (round128(kh*kw*Cin), 128) bf16,
    rows ordered (kh, kw, cin) to match _im2col_nhwc."""
    Cout, Cin, kh, kw = w.shape
    wt = jnp.transpose(w, (2, 3, 1, 0)).reshape(kh * kw * Cin, Cout)
    K = wt.shape[0]
    Kp, Np = _round_up(K, LANES), _round_up(Cout, LANES)
    return jnp.pad(wt, ((0, Kp - K), (0, Np - Cout))).astype(jnp.bfloat16)


def _prep_fc_w(w):
    """Torch linear weight (out, in) -> (round128(in), round128(out)) bf16."""
    out_f, in_f = w.shape
    wt = w.T
    return jnp.pad(
        wt, ((0, _round_up(in_f, LANES) - in_f), (0, _round_up(out_f, LANES) - out_f))
    ).astype(jnp.bfloat16)


def _prep_b(b):
    n = b.shape[0]
    return jnp.pad(b.astype(jnp.float32).reshape(1, -1),
                   ((0, 0), (0, _round_up(n, LANES) - n)))


def prepare_params(params):
    return {
        "w1": _prep_conv_w(params["c1_w"]), "b1": _prep_b(params["c1_b"]),
        "w2": _prep_conv_w(params["c2_w"]), "b2": _prep_b(params["c2_b"]),
        "w3": _prep_conv_w(params["c3_w"]), "b3": _prep_b(params["c3_b"]),
        "w4": _prep_fc_w(params["f1_w"]),   "b4": _prep_b(params["f1_b"]),
        "w5": _prep_fc_w(params["f2_w"]),   "b5": _prep_b(params["f2_b"]),
    }


# ---------------------------------------------------------------------------
# LeNetTanh forward
# ---------------------------------------------------------------------------
def init_params(key):
    ks = jax.random.split(key, 10)
    s = 0.1

    def rnd(k, shape):
        return jax.random.normal(k, shape, jnp.float32) * s

    return {
        "c1_w": rnd(ks[0], (6, 1, 5, 5)),    "c1_b": rnd(ks[1], (6,)),
        "c2_w": rnd(ks[2], (16, 6, 5, 5)),   "c2_b": rnd(ks[3], (16,)),
        "c3_w": rnd(ks[4], (120, 16, 5, 5)), "c3_b": rnd(ks[5], (120,)),
        "f1_w": rnd(ks[6], (84, 120)),       "f1_b": rnd(ks[7], (84,)),
        "f2_w": rnd(ks[8], (10, 84)),        "f2_b": rnd(ks[9], (10,)),
    }


def lenet_tanh_forward(prep, x):
    """x: (N, 1, 28, 28) NCHW float32 -> logits (N, 10)."""
    N = x.shape[0]
    x = jnp.transpose(x, (0, 2, 3, 1)).astype(jnp.float32)                 # NHWC (N,28,28,1)

    # conv1(1->6, k5, pad2) + tanh                     -- Pallas kernel #1
    p1, Ho, Wo = _im2col_nhwc(x, 5, 5, 2)                                  # (N*784, 25)
    Kp1 = prep["w1"].shape[0]
    p1 = jnp.pad(p1, ((0, 0), (0, Kp1 - p1.shape[1]))).astype(jnp.bfloat16)
    y = matmul_bias_tanh(p1, prep["w1"], prep["b1"])                       # (N*784, 128)
    y = y.reshape(N, Ho, Wo, LANES)[..., :6]                               # keep valid chans
    y = _avgpool2(y)                                                       # (N,14,14,6)

    # conv2(6->16, k5) + tanh                          -- Pallas kernel #2
    p2, Ho2, Wo2 = _im2col_nhwc(y, 5, 5, 0)                                # (N*100, 150)
    Kp2 = prep["w2"].shape[0]
    p2 = jnp.pad(p2, ((0, 0), (0, Kp2 - p2.shape[1]))).astype(jnp.bfloat16)
    y = matmul_bias_tanh(p2, prep["w2"], prep["b2"])                       # (N*100, 128)
    y = y.reshape(N, Ho2, Wo2, LANES)[..., :16]                            # keep valid chans
    y = _avgpool2(y)                                                       # (N,5,5,16)

    # conv3(16->120, k5 on 5x5 map) + tanh + fc1 + tanh + fc2   -- fused Pallas kernel #3
    x3 = y.reshape(N, -1)                                                  # (N, 400) in (kh,kw,c)
    Kp3 = prep["w3"].shape[0]
    Mp = _round_up(N, 8)
    x3 = jnp.pad(x3, ((0, Mp - N), (0, Kp3 - x3.shape[1]))).astype(jnp.bfloat16)
    logits = classifier(x3, prep["w3"], prep["b3"], prep["w4"], prep["b4"],
                        prep["w5"], prep["b5"])                            # (Mp, 128)
    return logits[:N, :10]


if __name__ == "__main__":
    key = jax.random.PRNGKey(0)
    pkey, xkey = jax.random.split(key)
    params = init_params(pkey)
    prep = prepare_params(params)          # one-time weight prep, outside the jitted forward
    # LeNet geometry requires 28x28 single-channel input (NCHW).
    x = jax.random.normal(xkey, (2, 1, 28, 28), jnp.float32)

    fwd = jax.jit(lenet_tanh_forward)
    logits = fwd(prep, x)
    jax.block_until_ready(logits)
    assert logits.shape == (2, 10) and logits.dtype == jnp.float32
    print("KERNEL_OK")
</pallas_src>

<mosaic_0001>
module attributes {stable_mosaic.version = 11 : i64} {
  func.func @_matmul_bias_tanh_kernel(%arg0: i32, %arg1: memref<392x128xbf16, #tpu.memory_space<vmem>>, %arg2: memref<128x128xbf16, #tpu.memory_space<vmem>>, %arg3: memref<1x128xf32, #tpu.memory_space<vmem>>, %arg4: memref<392x128xf32, #tpu.memory_space<vmem>>) attributes {dimension_semantics = [#tpu.dimension_semantics<parallel>], iteration_bounds = array<i64: 4>, scalar_prefetch = 0 : i64, scratch_operands = 0 : i64, tpu.core_type = #tpu.core_type<tc>, window_params = [{transform_indices = @transform_0, window_bounds = array<i64: 392, 128>}, {pipeline_mode = #tpu.pipeline_mode<synchronous>, transform_indices = @transform_1, window_bounds = array<i64: 128, 128>}, {pipeline_mode = #tpu.pipeline_mode<synchronous>, transform_indices = @transform_2, window_bounds = array<i64: 1, 128>}, {transform_indices = @transform_3, window_bounds = array<i64: 392, 128>}]} {
    %c0 = arith.constant 0 : index
    %c0_0 = arith.constant 0 : index
    %0 = vector.load %arg1[%c0, %c0_0] : memref<392x128xbf16, #tpu.memory_space<vmem>>, vector<392x128xbf16>
    %c0_1 = arith.constant 0 : index
    %c0_2 = arith.constant 0 : index
    %1 = vector.load %arg2[%c0_1, %c0_2] : memref<128x128xbf16, #tpu.memory_space<vmem>>, vector<128x128xbf16>
    %cst = arith.constant dense<0.000000e+00> : vector<392x128xf32>
    %2 = tpu.matmul %0, %1, %cst {dimension_numbers = #tpu.dot_dimension_numbers<[1], [0], [0], [1], [0, 0, 1, 1], [], []>} : vector<392x128xbf16>, vector<128x128xbf16>, vector<392x128xf32> -> vector<392x128xf32>
    %c0_3 = arith.constant 0 : index
    %c0_4 = arith.constant 0 : index
    %3 = vector.load %arg3[%c0_3, %c0_4] : memref<1x128xf32, #tpu.memory_space<vmem>>, vector<1x128xf32>
    %4 = vector.broadcast %3 : vector<1x128xf32> to vector<392x128xf32>
    %5 = arith.addf %2, %4 : vector<392x128xf32>
    %6 = math.tanh %5 : vector<392x128xf32>
    %c0_5 = arith.constant 0 : index
    %c0_6 = arith.constant 0 : index
    %7 = vector.load %arg4[%c0_5, %c0_6] : memref<392x128xf32, #tpu.memory_space<vmem>>, vector<392x128xf32>
    tpu.vector_store %arg4[%c0_5, %c0_6], %6 {strides = array<i32>} : memref<392x128xf32, #tpu.memory_space<vmem>>, vector<392x128xf32>,
    return
  }
  func.func @transform_0(%arg0: i32) -> (i32, i32) {
    %c0_i32 = arith.constant 0 : i32
    %c0_i32_0 = arith.constant 0 : i32
    return %arg0, %c0_i32 : i32, i32
  }
  func.func @transform_1(%arg0: i32) -> (i32, i32) {
    %c0_i32 = arith.constant 0 : i32
    %c0_i32_0 = arith.constant 0 : i32
    %c0_i32_1 = arith.constant 0 : i32
    return %c0_i32, %c0_i32_0 : i32, i32
  }
  func.func @transform_2(%arg0: i32) -> (i32, i32) {
    %c0_i32 = arith.constant 0 : i32
    %c0_i32_0 = arith.constant 0 : i32
    %c0_i32_1 = arith.constant 0 : i32
    return %c0_i32, %c0_i32_0 : i32, i32
  }
  func.func @transform_3(%arg0: i32) -> (i32, i32) {
    %c0_i32 = arith.constant 0 : i32
    %c0_i32_0 = arith.constant 0 : i32
    return %arg0, %c0_i32 : i32, i32
  }
}

module attributes {stable_mosaic.version = 11 : i64} {
  func.func @_matmul_bias_tanh_kernel(%arg0: i32, %arg1: memref<200x256xbf16, #tpu.memory_space<vmem>>, %arg2: memref<256x128xbf16, #tpu.memory_space<vmem>>, %arg3: memref<1x128xf32, #tpu.memory_space<vmem>>, %arg4: memref<200x128xf32, #tpu.memory_space<vmem>>) attributes {dimension_semantics = [#tpu.dimension_semantics<parallel>], iteration_bounds = array<i64: 1>, scalar_prefetch = 0 : i64, scratch_operands = 0 : i64, tpu.core_type = #tpu.core_type<tc>, window_params = [{transform_indices = @transform_0, window_bounds = array<i64: 200, 256>}, {pipeline_mode = #tpu.pipeline_mode<synchronous>, transform_indices = @transform_1, window_bounds = array<i64: 256, 128>}, {pipeline_mode = #tpu.pipeline_mode<synchronous>, transform_indices = @transform_2, window_bounds = array<i64: 1, 128>}, {transform_indices = @transform_3, window_bounds = array<i64: 200, 128>}]} {
    %c0 = arith.constant 0 : index
    %c0_0 = arith.constant 0 : index
    %0 = vector.load %arg1[%c0, %c0_0] : memref<200x256xbf16, #tpu.memory_space<vmem>>, vector<200x256xbf16>
    %c0_1 = arith.constant 0 : index
    %c0_2 = arith.constant 0 : index
    %1 = vector.load %arg2[%c0_1, %c0_2] : memref<256x128xbf16, #tpu.memory_space<vmem>>, vector<256x128xbf16>
    %cst = arith.constant dense<0.000000e+00> : vector<200x128xf32>
    %2 = tpu.matmul %0, %1, %cst {dimension_numbers = #tpu.dot_dimension_numbers<[1], [0], [0], [1], [0, 0, 1, 1], [], []>} : vector<200x256xbf16>, vector<256x128xbf16>, vector<200x128xf32> -> vector<200x128xf32>
    %c0_3 = arith.constant 0 : index
    %c0_4 = arith.constant 0 : index
    %3 = vector.load %arg3[%c0_3, %c0_4] : memref<1x128xf32, #tpu.memory_space<vmem>>, vector<1x128xf32>
    %4 = vector.broadcast %3 : vector<1x128xf32> to vector<200x128xf32>
    %5 = arith.addf %2, %4 : vector<200x128xf32>
    %6 = math.tanh %5 : vector<200x128xf32>
    %c0_5 = arith.constant 0 : index
    %c0_6 = arith.constant 0 : index
    %7 = vector.load %arg4[%c0_5, %c0_6] : memref<200x128xf32, #tpu.memory_space<vmem>>, vector<200x128xf32>
    tpu.vector_store %arg4[%c0_5, %c0_6], %6 {strides = array<i32>} : memref<200x128xf32, #tpu.memory_space<vmem>>, vector<200x128xf32>,
    return
  }
  func.func @transform_0(%arg0: i32) -> (i32, i32) {
    %c0_i32 = arith.constant 0 : i32
    %c0_i32_0 = arith.constant 0 : i32
    return %arg0, %c0_i32 : i32, i32
  }
  func.func @transform_1(%arg0: i32) -> (i32, i32) {
    %c0_i32 = arith.constant 0 : i32
    %c0_i32_0 = arith.constant 0 : i32
    %c0_i32_1 = arith.constant 0 : i32
    return %c0_i32, %c0_i32_0 : i32, i32
  }
  func.func @transform_2(%arg0: i32) -> (i32, i32) {
    %c0_i32 = arith.constant 0 : i32
    %c0_i32_0 = arith.constant 0 : i32
    %c0_i32_1 = arith.constant 0 : i32
    return %c0_i32, %c0_i32_0 : i32, i32
  }
  func.func @transform_3(%arg0: i32) -> (i32, i32) {
    %c0_i32 = arith.constant 0 : i32
    %c0_i32_0 = arith.constant 0 : i32
    return %arg0, %c0_i32 : i32, i32
  }
}

module attributes {stable_mosaic.version = 11 : i64} {
  func.func @_classifier_kernel(%arg0: i32, %arg1: memref<8x512xbf16, #tpu.memory_space<vmem>>, %arg2: memref<512x128xbf16, #tpu.memory_space<vmem>>, %arg3: memref<1x128xf32, #tpu.memory_space<vmem>>, %arg4: memref<128x128xbf16, #tpu.memory_space<vmem>>, %arg5: memref<1x128xf32, #tpu.memory_space<vmem>>, %arg6: memref<128x128xbf16, #tpu.memory_space<vmem>>, %arg7: memref<1x128xf32, #tpu.memory_space<vmem>>, %arg8: memref<8x128xf32, #tpu.memory_space<vmem>>) attributes {dimension_semantics = [#tpu.dimension_semantics<arbitrary>], iteration_bounds = array<i64: 1>, scalar_prefetch = 0 : i64, scratch_operands = 0 : i64, tpu.core_type = #tpu.core_type<tc>, window_params = [{pipeline_mode = #tpu.pipeline_mode<synchronous>, transform_indices = @transform_0, window_bounds = array<i64: 8, 512>}, {pipeline_mode = #tpu.pipeline_mode<synchronous>, transform_indices = @transform_1, window_bounds = array<i64: 512, 128>}, {pipeline_mode = #tpu.pipeline_mode<synchronous>, transform_indices = @transform_2, window_bounds = array<i64: 1, 128>}, {pipeline_mode = #tpu.pipeline_mode<synchronous>, transform_indices = @transform_3, window_bounds = array<i64: 128, 128>}, {pipeline_mode = #tpu.pipeline_mode<synchronous>, transform_indices = @transform_4, window_bounds = array<i64: 1, 128>}, {pipeline_mode = #tpu.pipeline_mode<synchronous>, transform_indices = @transform_5, window_bounds = array<i64: 128, 128>}, {pipeline_mode = #tpu.pipeline_mode<synchronous>, transform_indices = @transform_6, window_bounds = array<i64: 1, 128>}, {pipeline_mode = #tpu.pipeline_mode<synchronous>, transform_indices = @transform_7, window_bounds = array<i64: 8, 128>}]} {
    %c0 = arith.constant 0 : index
    %c0_0 = arith.constant 0 : index
    %0 = vector.load %arg1[%c0, %c0_0] : memref<8x512xbf16, #tpu.memory_space<vmem>>, vector<8x512xbf16>
    %c0_1 = arith.constant 0 : index
    %c0_2 = arith.constant 0 : index
    %1 = vector.load %arg2[%c0_1, %c0_2] : memref<512x128xbf16, #tpu.memory_space<vmem>>, vector<512x128xbf16>
    %cst = arith.constant dense<0.000000e+00> : vector<8x128xf32>
    %2 = tpu.matmul %0, %1, %cst {dimension_numbers = #tpu.dot_dimension_numbers<[1], [0], [0], [1], [0, 0, 1, 1], [], []>} : vector<8x512xbf16>, vector<512x128xbf16>, vector<8x128xf32> -> vector<8x128xf32>
    %c0_3 = arith.constant 0 : index
    %c0_4 = arith.constant 0 : index
    %3 = vector.load %arg3[%c0_3, %c0_4] : memref<1x128xf32, #tpu.memory_space<vmem>>, vector<1x128xf32>
    %4 = vector.broadcast %3 : vector<1x128xf32> to vector<8x128xf32>
    %5 = arith.addf %2, %4 : vector<8x128xf32>
    %6 = math.tanh %5 : vector<8x128xf32>
    %7 = arith.truncf %6 : vector<8x128xf32> to vector<8x128xbf16>
    %c0_5 = arith.constant 0 : index
    %c0_6 = arith.constant 0 : index
    %8 = vector.load %arg4[%c0_5, %c0_6] : memref<128x128xbf16, #tpu.memory_space<vmem>>, vector<128x128xbf16>
    %cst_7 = arith.constant dense<0.000000e+00> : vector<8x128xf32>
    %9 = tpu.matmul %7, %8, %cst_7 {dimension_numbers = #tpu.dot_dimension_numbers<[1], [0], [0], [1], [0, 0, 1, 1], [], []>} : vector<8x128xbf16>, vector<128x128xbf16>, vector<8x128xf32> -> vector<8x128xf32>
    %c0_8 = arith.constant 0 : index
    %c0_9 = arith.constant 0 : index
    %10 = vector.load %arg5[%c0_8, %c0_9] : memref<1x128xf32, #tpu.memory_space<vmem>>, vector<1x128xf32>
    %11 = vector.broadcast %10 : vector<1x128xf32> to vector<8x128xf32>
    %12 = arith.addf %9, %11 : vector<8x128xf32>
    %13 = math.tanh %12 : vector<8x128xf32>
    %14 = arith.truncf %13 : vector<8x128xf32> to vector<8x128xbf16>
    %c0_10 = arith.constant 0 : index
    %c0_11 = arith.constant 0 : index
    %15 = vector.load %arg6[%c0_10, %c0_11] : memref<128x128xbf16, #tpu.memory_space<vmem>>, vector<128x128xbf16>
    %cst_12 = arith.constant dense<0.000000e+00> : vector<8x128xf32>
    %16 = tpu.matmul %14, %15, %cst_12 {dimension_numbers = #tpu.dot_dimension_numbers<[1], [0], [0], [1], [0, 0, 1, 1], [], []>} : vector<8x128xbf16>, vector<128x128xbf16>, vector<8x128xf32> -> vector<8x128xf32>
    %c0_13 = arith.constant 0 : index
    %c0_14 = arith.constant 0 : index
    %17 = vector.load %arg7[%c0_13, %c0_14] : memref<1x128xf32, #tpu.memory_space<vmem>>, vector<1x128xf32>
    %18 = vector.broadcast %17 : vector<1x128xf32> to vector<8x128xf32>
    %19 = arith.addf %16, %18 : vector<8x128xf32>
    %c0_15 = arith.constant 0 : index
    %c0_16 = arith.constant 0 : index
    %20 = vector.load %arg8[%c0_15, %c0_16] : memref<8x128xf32, #tpu.memory_space<vmem>>, vector<8x128xf32>
    tpu.vector_store %arg8[%c0_15, %c0_16], %19 {strides = array<i32>} : memref<8x128xf32, #tpu.memory_space<vmem>>, vector<8x128xf32>,
    return
  }
  func.func @transform_0(%arg0: i32) -> (i32, i32) {
    %c0_i32 = arith.constant 0 : i32
    %c0_i32_0 = arith.constant 0 : i32
    %c0_i32_1 = arith.constant 0 : i32
    return %c0_i32, %c0_i32_0 : i32, i32
  }
  func.func @transform_1(%arg0: i32) -> (i32, i32) {
    %c0_i32 = arith.constant 0 : i32
    %c0_i32_0 = arith.constant 0 : i32
    %c0_i32_1 = arith.constant 0 : i32
    return %c0_i32, %c0_i32_0 : i32, i32
  }
  func.func @transform_2(%arg0: i32) -> (i32, i32) {
    %c0_i32 = arith.constant 0 : i32
    %c0_i32_0 = arith.constant 0 : i32
    %c0_i32_1 = arith.constant 0 : i32
    return %c0_i32, %c0_i32_0 : i32, i32
  }
  func.func @transform_3(%arg0: i32) -> (i32, i32) {
    %c0_i32 = arith.constant 0 : i32
    %c0_i32_0 = arith.constant 0 : i32
    %c0_i32_1 = arith.constant 0 : i32
    return %c0_i32, %c0_i32_0 : i32, i32
  }
  func.func @transform_4(%arg0: i32) -> (i32, i32) {
    %c0_i32 = arith.constant 0 : i32
    %c0_i32_0 = arith.constant 0 : i32
    %c0_i32_1 = arith.constant 0 : i32
    return %c0_i32, %c0_i32_0 : i32, i32
  }
  func.func @transform_5(%arg0: i32) -> (i32, i32) {
    %c0_i32 = arith.constant 0 : i32
    %c0_i32_0 = arith.constant 0 : i32
    %c0_i32_1 = arith.constant 0 : i32
    return %c0_i32, %c0_i32_0 : i32, i32
  }
  func.func @transform_6(%arg0: i32) -> (i32, i32) {
    %c0_i32 = arith.constant 0 : i32
    %c0_i32_0 = arith.constant 0 : i32
    %c0_i32_1 = arith.constant 0 : i32
    return %c0_i32, %c0_i32_0 : i32, i32
  }
  func.func @transform_7(%arg0: i32) -> (i32, i32) {
    %c0_i32 = arith.constant 0 : i32
    %c0_i32_0 = arith.constant 0 : i32
    %c0_i32_1 = arith.constant 0 : i32
    return %c0_i32, %c0_i32_0 : i32, i32
  }
}

</mosaic_0001>

<llo_original>
// kernel: lenet_tanh_forward.3
$region0: #{lenet_tanh_forward.3}
  #allocation0 [shape = 'u32[]', space=smem, size = 0x4, offset = 0x4, fixed_abs, tag = 'smem constant byte address 0x4 - core index']
  #allocation1 [shape = 'u32[72,128]{1,0:T(1,128)}', space=vmem, size = 0x9000, scoped, tag = 'internal scratch']
  %s0 = inlined_call_operand.vmem [shape: bf16[1568,128], index: 0, kind: input, shape index: {}]
  %s1 = inlined_call_operand.vmem [shape: bf16[128,128], index: 1, kind: input, shape index: {}]
  %s2 = inlined_call_operand.vmem [shape: f32[1,128], index: 2, kind: input, shape index: {}]
  %s3 = inlined_call_operand.vmem [shape: f32[1568,128], index: 3, kind: output, shape index: {}]
  %s4 = sld [smem:[#allocation0]]
  $region45: #{lenet_tanh_forward.3} parent=0
    _
  %s6 = ssub.s32 1, %s4
  %s7 = scalar_select 0, %s6, %s4
  loop: start=0, step=1, limit=6
  $region2: #{lenet_tanh_forward.3} parent=0 // loop_pre_header
    _
  $region3: #{lenet_tanh_forward.3} parent=0 // loop_header
    %s9 = sphi 0, %s13
    %p10 = scmp.ge.s32.totalorder %s9, 6
    %s19 = sphi 0, %s21
    %s22 = sphi 0, %s19
    %s23 = sphi 0, %s22
    %s39 = sphi 0, %s23
    %s43 = sphi 0, %s43
    %s45 = sphi 0, %s43
    %s46 = sphi 0, %s45
    %s60 = sphi 0, %s46
    %s64 = sphi 0, %s64
    %s66 = sphi 0, %s64
    %s67 = sphi 0, %s66
    %s81 = sphi 0, %s67
    %s87 = sphi 0, %s89
    %s90 = sphi 0, %s87
    %s91 = sphi 0, %s90
    %s107 = sphi 0, %s91
  $region4: #{lenet_tanh_forward.3} parent=0 // loop_header_branch
    %12 = sbr.rel (%p10) target = $region8
  $region5: #{lenet_tanh_forward.3} parent=0 // loop_body
    %s14 = ssub.s32 %s9, 1
    %s15 = ssub.s32 %s9, 2
    %s16 = sadd.s32 %s9, 1
    %s17 = ssub.s32 %s9, %s16
    %p18 = scmp.eq.s32.totalorder %s17, 0
    %s20 = sadd.s32 %s19, 1
    %s21 = scalar_select %p18, %s19, %s20
    %p24 = pneg %p18
    %p25 = scmp.eq.s32.totalorder %s9, 3
    %p26 = por %p24, %p25
    %p27 = scmp.ne.s32.totalorder %s19, %s22
    %p28 = scmp.eq.s32.totalorder %s9, 0
    %p29 = por %p27, %p28
    %p30 = scmp.ne.s32.totalorder %s19, %s22
    %p31 = scmp.eq.s32.totalorder %s14, 3
    %p32 = por %p30, %p31
    %p33 = scmp.ne.s32.totalorder %s22, %s23
    %p34 = scmp.eq.s32.totalorder %s14, 0
    %p35 = por %p33, %p34
    %p36 = scmp.ne.s32.totalorder %s22, %s23
    %p37 = scmp.eq.s32.totalorder %s15, 3
    %p38 = por %p36, %p37
    %p40 = scmp.ne.s32.totalorder %s23, %s39
    %p41 = scmp.eq.s32.totalorder %s15, 0
    %p42 = por %p40, %p41
    %s44 = sadd.s32 %s43, 1
    %p47 = scmp.eq.s32.totalorder %s9, 3
    %p48 = scmp.ne.s32.totalorder %s43, %s45
    %p49 = scmp.eq.s32.totalorder %s9, 0
    %p50 = por %p48, %p49
    %p51 = scmp.ne.s32.totalorder %s43, %s45
    %p52 = scmp.eq.s32.totalorder %s14, 3
    %p53 = por %p51, %p52
    %p54 = scmp.ne.s32.totalorder %s45, %s46
    %p55 = scmp.eq.s32.totalorder %s14, 0
    %p56 = por %p54, %p55
    %p57 = scmp.ne.s32.totalorder %s45, %s46
    %p58 = scmp.eq.s32.totalorder %s15, 3
    %p59 = por %p57, %p58
    %p61 = scmp.ne.s32.totalorder %s46, %s60
    %p62 = scmp.eq.s32.totalorder %s15, 0
    %p63 = por %p61, %p62
    %s65 = sadd.s32 %s64, 1
    %p68 = scmp.eq.s32.totalorder %s9, 3
    %p69 = scmp.ne.s32.totalorder %s64, %s66
    %p70 = scmp.eq.s32.totalorder %s9, 0
    %p71 = por %p69, %p70
    %p72 = scmp.ne.s32.totalorder %s64, %s66
    %p73 = scmp.eq.s32.totalorder %s14, 3
    %p74 = por %p72, %p73
    %p75 = scmp.ne.s32.totalorder %s66, %s67
    %p76 = scmp.eq.s32.totalorder %s14, 0
    %p77 = por %p75, %p76
    %p78 = scmp.ne.s32.totalorder %s66, %s67
    %p79 = scmp.eq.s32.totalorder %s15, 3
    %p80 = por %p78, %p79
    %p82 = scmp.ne.s32.totalorder %s67, %s81
    %p83 = scmp.eq.s32.totalorder %s15, 0
    %p84 = por %p82, %p83
    %s85 = ssub.s32 %s9, %s16
    %p86 = scmp.eq.s32.totalorder %s85, 0
    %s88 = sadd.s32 %s87, 1
    %s89 = scalar_select %p86, %s87, %s88
    %p92 = pneg %p86
    %p93 = scmp.eq.s32.totalorder %s9, 3
    %p94 = por %p92, %p93
    %p95 = scmp.ne.s32.totalorder %s87, %s90
    %p96 = scmp.eq.s32.totalorder %s9, 0
    %p97 = por %p95, %p96
    %p98 = scmp.ne.s32.totalorder %s87, %s90
    %p99 = scmp.eq.s32.totalorder %s14, 3
    %p100 = por %p98, %p99
    %p101 = scmp.ne.s32.totalorder %s90, %s91
    %p102 = scmp.eq.s32.totalorder %s14, 0
    %p103 = por %p101, %p102
    %p104 = scmp.ne.s32.totalorder %s90, %s91
    %p105 = scmp.eq.s32.totalorder %s15, 3
    %p106 = por %p104, %p105
    %p108 = scmp.ne.s32.totalorder %s91, %s107
    %p109 = scmp.eq.s32.totalorder %s15, 0
    %p110 = por %p108, %p109
    %p111 = scmp.le.s32.totalorder 1, %s9
    %p112 = scmp.lt.s32.totalorder %s9, 5
    %p113 = pnand %p111, %p112
    %p114 = pneg %p113
    // Predicated region
    $region9: #{lenet_tanh_forward.3} parent=5 // pred_check
      _
    $region10: #{lenet_tanh_forward.3} parent=5 // pred_check_branch
      %116 = sbr.rel (%p113) target = $region12
    $region11: #{lenet_tanh_forward.3} parent=5 // pred_region
      %s117 = ssub.s32 %s9, 1
      // Predicated region
      $region13: #{lenet_tanh_forward.3} parent=11 // pred_check
        %p118 = pneg %p56
      $region14: #{lenet_tanh_forward.3} parent=11 // pred_check_branch
        %120 = sbr.rel (%p118) target = $region16
      $region15: #{lenet_tanh_forward.3} parent=11 // pred_region
        _
      $region16: #{lenet_tanh_forward.3} parent=11 // pred_fallthru
        _
      // Predicated region
      $region17: #{lenet_tanh_forward.3} parent=11 // pred_check
        %p121 = pneg %p77
      $region18: #{lenet_tanh_forward.3} parent=11 // pred_check_branch
        %123 = sbr.rel (%p121) target = $region20
      $region19: #{lenet_tanh_forward.3} parent=11 // pred_region
        _
      $region20: #{lenet_tanh_forward.3} parent=11 // pred_fallthru
        _
    $region12: #{lenet_tanh_forward.3} parent=5 // pred_fallthru
      _
    %p124 = scmp.lt.s32.totalorder %s9, 4
    // Predicated region
    $region21: #{lenet_tanh_forward.3} parent=5 // pred_check
      %p125 = pneg %p124
    $region22: #{lenet_tanh_forward.3} parent=5 // pred_check_branch
      %127 = sbr.rel (%p125) target = $region24
    $region23: #{lenet_tanh_forward.3} parent=5 // pred_region
      // Predicated region
      $region25: #{lenet_tanh_forward.3} parent=23 // pred_check
        %p128 = pneg %p29
      $region26: #{lenet_tanh_forward.3} parent=23 // pred_check_branch
        %130 = sbr.rel (%p128) target = $region28
      $region27: #{lenet_tanh_forward.3} parent=23 // pred_region
        %s131 = smul.u32 49, %s9
        %p132 = scmp.lt.s32.totalorder %s131, 195
        %s133 = scalar_select %p132, %s131, 195
        %s134 = smul.addr %s133, 4
        %s135 = scalar_lea.vmem %s0, %s134
        %s136 = smul.u32 49, %s9
      $region28: #{lenet_tanh_forward.3} parent=23 // pred_fallthru
        _
    $region24: #{lenet_tanh_forward.3} parent=5 // pred_fallthru
      _
    %p137 = scmp.le.s32.totalorder 1, %s9
    %p138 = scmp.lt.s32.totalorder %s9, 5
    %p139 = pnand %p137, %p138
    %p140 = pneg %p139
    // Predicated region
    $region29: #{lenet_tanh_forward.3} parent=5 // pred_check
      _
    $region30: #{lenet_tanh_forward.3} parent=5 // pred_check_branch
      %142 = sbr.rel (%p139) target = $region32
    $region31: #{lenet_tanh_forward.3} parent=5 // pred_region
      %s143 = ssub.s32 %s9, 1
      %s144 = smul.u32 49, %s14
      %p145 = scmp.lt.s32.totalorder %s144, 195
      %s146 = scalar_select %p145, %s144, 195
      %s147 = smul.addr %s146, 4
      %s148 = scalar_lea.vmem %s0, %s147
      %p149 = pneg %p35
      %p150 = pneg %p32
      %p151 = pneg %p56
      %p152 = pneg %p53
      %p153 = pneg %p77
      %p154 = pneg %p74
      %p155 = pneg %p103
      %p156 = pneg %p100
      %s157 = smul.u32 49, %s14
      %p158 = scmp.lt.s32.totalorder %s157, 195
      %s159 = scalar_select %p158, %s157, 195
      %s160 = smul.addr %s159, 8
      %s161 = scalar_lea.vmem %s3, %s160
      %s162 = smul.u32 49, %s14
      %p163 = scmp.lt.s32.totalorder %s162, 195
      %s164 = scalar_select %p163, %s162, 195
      %s165 = smul.addr %s164, 4
      %s166 = scalar_lea.vmem %s0, %s165
      %s167 = smul.u32 49, %s14
      %s168 = smul.u32 49, %s14
      %p169 = scmp.lt.s32.totalorder %s168, 195
      %s170 = scalar_select %p169, %s168, 195
      %s171 = smul.addr %s170, 8
      %s172 = scalar_lea.vmem %s3, %s171
      %s173 = smul.u32 49, %s14
      %v174 = vld [vmem:[%s166] sm:$0xf]
      %v175 = vld [vmem:[%s166 + $0x4] sm:$0xf]
      %v176 = vld [vmem:[%s166 + $0x8] sm:$0xf]
      %v177 = vld [vmem:[%s166 + $0xc] sm:$0xf]
      %v178 = vld [vmem:[%s166 + $0x10] sm:$0xf]
      %v179 = vld [vmem:[%s166 + $0x14] sm:$0xf]
      %v180 = vld [vmem:[%s166 + $0x18] sm:$0xf]
      %v181 = vld [vmem:[%s166 + $0x1c] sm:$0xf]
      %v182 = vld [vmem:[%s166 + $0x20] sm:$0xf]
      %v183 = vld [vmem:[%s166 + $0x24] sm:$0xf]
      %v184 = vld [vmem:[%s166 + $0x28] sm:$0xf]
      %v185 = vld [vmem:[%s166 + $0x2c] sm:$0xf]
      %v186 = vld [vmem:[%s166 + $0x30] sm:$0xf]
      %v187 = vld [vmem:[%s166 + $0x34] sm:$0xf]
      %v188 = vld [vmem:[%s166 + $0x38] sm:$0xf]
      %v189 = vld [vmem:[%s166 + $0x3c] sm:$0xf]
      %v190 = vld [vmem:[%s166 + $0x40] sm:$0xf]
      %v191 = vld [vmem:[%s166 + $0x44] sm:$0xf]
      %v192 = vld [vmem:[%s166 + $0x48] sm:$0xf]
      %v193 = vld [vmem:[%s166 + $0x4c] sm:$0xf]
      %v194 = vld [vmem:[%s166 + $0x50] sm:$0xf]
      %v195 = vld [vmem:[%s166 + $0x54] sm:$0xf]
      %v196 = vld [vmem:[%s166 + $0x58] sm:$0xf]
      %v197 = vld [vmem:[%s166 + $0x5c] sm:$0xf]
      %v198 = vld [vmem:[%s166 + $0x60] sm:$0xf]
      %v199 = vld [vmem:[%s166 + $0x64] sm:$0xf]
      %v200 = vld [vmem:[%s166 + $0x68] sm:$0xf]
      %v201 = vld [vmem:[%s166 + $0x6c] sm:$0xf]
      %v202 = vld [vmem:[%s166 + $0x70] sm:$0xf]
      %v203 = vld [vmem:[%s166 + $0x74] sm:$0xf]
      %v204 = vld [vmem:[%s166 + $0x78] sm:$0xf]
      %v205 = vld [vmem:[%s166 + $0x7c] sm:$0xf]
      %v206 = vld [vmem:[%s166 + $0x80] sm:$0xf]
      %v207 = vld [vmem:[%s166 + $0x84] sm:$0xf]
      %v208 = vld [vmem:[%s166 + $0x88] sm:$0xf]
      %v209 = vld [vmem:[%s166 + $0x8c] sm:$0xf]
      %v210 = vld [vmem:[%s166 + $0x90] sm:$0xf]
      %v211 = vld [vmem:[%s166 + $0x94] sm:$0xf]
      %v212 = vld [vmem:[%s166 + $0x98] sm:$0xf]
      %v213 = vld [vmem:[%s166 + $0x9c] sm:$0xf]
      %v214 = vld [vmem:[%s166 + $0xa0] sm:$0xf]
      %v215 = vld [vmem:[%s166 + $0xa4] sm:$0xf]
      %v216 = vld [vmem:[%s166 + $0xa8] sm:$0xf]
      %v217 = vld [vmem:[%s166 + $0xac] sm:$0xf]
      %v218 = vld [vmem:[%s166 + $0xb0] sm:$0xf]
      %v219 = vld [vmem:[%s166 + $0xb4] sm:$0xf]
      %v220 = vld [vmem:[%s166 + $0xb8] sm:$0xf]
      %v221 = vld [vmem:[%s166 + $0xbc] sm:$0xf]
      %v222 = vld [vmem:[%s166 + $0xc0] sm:$0xf]
      %v223 = vld [vmem:[%s1] sm:$0xf]
      %v224 = vld [vmem:[%s1 + $0x4] sm:$0xf]
      %v225 = vld [vmem:[%s1 + $0x8] sm:$0xf]
      %v226 = vld [vmem:[%s1 + $0xc] sm:$0xf]
      %v227 = vld [vmem:[%s1 + $0x10] sm:$0xf]
      %v228 = vld [vmem:[%s1 + $0x14] sm:$0xf]
      %v229 = vld [vmem:[%s1 + $0x18] sm:$0xf]
      %v230 = vld [vmem:[%s1 + $0x1c] sm:$0xf]
      %v231 = vld [vmem:[%s1 + $0x20] sm:$0xf]
      %v232 = vld [vmem:[%s1 + $0x24] sm:$0xf]
      %v233 = vld [vmem:[%s1 + $0x28] sm:$0xf]
      %v234 = vld [vmem:[%s1 + $0x2c] sm:$0xf]
      %v235 = vld [vmem:[%s1 + $0x30] sm:$0xf]
      %v236 = vld [vmem:[%s1 + $0x34] sm:$0xf]
      %v237 = vld [vmem:[%s1 + $0x38] sm:$0xf]
      %v238 = vld [vmem:[%s1 + $0x3c] sm:$0xf]
      %v239 = vld [vmem:[%s2] sm:$0x1]
      %v241 = vperm.slane %v239, 0
      %v292 = vunpack.c.l.b16 %v174
      %v293 = vunpack.c.l.b16 %v175
      %v294 = vunpack.c.l.b16 %v176
      %v295 = vunpack.c.l.b16 %v177
      %v296 = vunpack.c.l.b16 %v178
      %v297 = vunpack.c.l.b16 %v179
      %v298 = vunpack.c.l.b16 %v180
      %v299 = vunpack.c.l.b16 %v181
      %v300 = vunpack.c.l.b16 %v182
      %v301 = vunpack.c.l.b16 %v183
      %v302 = vunpack.c.l.b16 %v184
      %v303 = vunpack.c.l.b16 %v185
      %v304 = vunpack.c.l.b16 %v186
      %v305 = vunpack.c.l.b16 %v187
      %v306 = vunpack.c.l.b16 %v188
      %v307 = vunpack.c.l.b16 %v189
      %v308 = vunpack.c.l.b16 %v190
      %v309 = vunpack.c.l.b16 %v191
      %v310 = vunpack.c.l.b16 %v192
      %v311 = vunpack.c.l.b16 %v193
      %v312 = vunpack.c.l.b16 %v194
      %v313 = vunpack.c.l.b16 %v195
      %v314 = vunpack.c.l.b16 %v196
      %v315 = vunpack.c.l.b16 %v197
      %v316 = vunpack.c.l.b16 %v198
      %v317 = vunpack.c.l.b16 %v199
      %v318 = vunpack.c.l.b16 %v200
      %v319 = vunpack.c.l.b16 %v201
      %v320 = vunpack.c.l.b16 %v202
      %v321 = vunpack.c.l.b16 %v203
      %v322 = vunpack.c.l.b16 %v204
      %v323 = vunpack.c.l.b16 %v205
      %v324 = vunpack.c.l.b16 %v206
      %v325 = vunpack.c.l.b16 %v207
      %v326 = vunpack.c.l.b16 %v208
      %v327 = vunpack.c.l.b16 %v209
      %v328 = vunpack.c.l.b16 %v210
      %v329 = vunpack.c.l.b16 %v211
      %v330 = vunpack.c.l.b16 %v212
      %v331 = vunpack.c.l.b16 %v213
      %v332 = vunpack.c.l.b16 %v214
      %v333 = vunpack.c.l.b16 %v215
      %v334 = vunpack.c.l.b16 %v216
      %v335 = vunpack.c.l.b16 %v217
      %v336 = vunpack.c.l.b16 %v218
      %v337 = vunpack.c.l.b16 %v219
      %v338 = vunpack.c.l.b16 %v220
      %v339 = vunpack.c.l.b16 %v221
      %v340 = vunpack.c.l.b16 %v222
      %v341 = vpack.c.b16 %v293, %v292
      %v342 = vpack.c.b16 %v295, %v294
      %v343 = vpack.c.b16 %v297, %v296
      %v344 = vpack.c.b16 %v299, %v298
      %v345 = vpack.c.b16 %v301, %v300
      %v346 = vpack.c.b16 %v303, %v302
      %v347 = vpack.c.b16 %v305, %v304
      %v348 = vpack.c.b16 %v307, %v306
      %v349 = vpack.c.b16 %v309, %v308
      %v350 = vpack.c.b16 %v311, %v310
      %v351 = vpack.c.b16 %v313, %v312
      %v352 = vpack.c.b16 %v315, %v314
      %v353 = vpack.c.b16 %v317, %v316
      %v354 = vpack.c.b16 %v319, %v318
      %v355 = vpack.c.b16 %v321, %v320
      %v356 = vpack.c.b16 %v323, %v322
      %v357 = vpack.c.b16 %v325, %v324
      %v358 = vpack.c.b16 %v327, %v326
      %v359 = vpack.c.b16 %v329, %v328
      %v360 = vpack.c.b16 %v331, %v330
      %v361 = vpack.c.b16 %v333, %v332
      %v362 = vpack.c.b16 %v335, %v334
      %v363 = vpack.c.b16 %v337, %v336
      %v364 = vpack.c.b16 %v339, %v338
      %v365 = vpack.c.b16 %v340, %v340
      %v407 = vunpack.c.l.b16 %v223
      %v408 = vunpack.c.l.b16 %v224
      %v409 = vunpack.c.l.b16 %v225
      %v410 = vunpack.c.l.b16 %v226
      %v411 = vunpack.c.l.b16 %v227
      %v412 = vunpack.c.l.b16 %v228
      %v413 = vunpack.c.l.b16 %v229
      %v414 = vunpack.c.l.b16 %v230
      %v415 = vunpack.c.l.b16 %v231
      %v416 = vunpack.c.l.b16 %v232
      %v417 = vunpack.c.l.b16 %v233
      %v418 = vunpack.c.l.b16 %v234
      %v419 = vunpack.c.l.b16 %v235
      %v420 = vunpack.c.l.b16 %v236
      %v421 = vunpack.c.l.b16 %v237
      %v422 = vunpack.c.l.b16 %v238
      %v423 = vpack.c.b16 %v408, %v407
      %v424 = vpack.c.b16 %v410, %v409
      %v425 = vpack.c.b16 %v412, %v411
      %v426 = vpack.c.b16 %v414, %v413
      %v427 = vpack.c.b16 %v416, %v415
      %v428 = vpack.c.b16 %v418, %v417
      %v429 = vpack.c.b16 %v420, %v419
      %v430 = vpack.c.b16 %v422, %v421
      %439 = vmatpush.bf16.msra.mxu0 %v430
      %440 = vmatpush.bf16.msra.mxu0 %v429
      %441 = vmatpush.bf16.msra.mxu0 %v428
      %442 = vmatpush.bf16.msra.mxu0 %v427
      %443 = vmatpush.bf16.msra.mxu0 %v426
      %444 = vmatpush.bf16.msra.mxu0 %v425
      %445 = vmatpush.bf16.msra.mxu0 %v424
      %446 = vmatpush.bf16.msra.mxu0 %v423
      %447 = vmatmul.bf16.gmra.mxu0 %v341
      %v448 = vpop.f32.mrf.mxu0
      %v449 = vadd.f32 %v241, %v448
      %v450 = vpop.f32.mrf.mxu0
      %v451 = vadd.f32 %v241, %v450
      %452 = vmatmul.bf16.gmra.mxu0 %v342
      %v453 = vpop.f32.mrf.mxu0
      %v454 = vadd.f32 %v241, %v453
      %v455 = vpop.f32.mrf.mxu0
      %v456 = vadd.f32 %v241, %v455
      %457 = vmatmul.bf16.gmra.mxu0 %v343
      %v458 = vpop.f32.mrf.mxu0
      %v459 = vadd.f32 %v241, %v458
      %v460 = vpop.f32.mrf.mxu0
      %v461 = vadd.f32 %v241, %v460
      %462 = vmatmul.bf16.gmra.mxu0 %v344
      %v463 = vpop.f32.mrf.mxu0
      %v464 = vadd.f32 %v241, %v463
      %v465 = vpop.f32.mrf.mxu0
      %v466 = vadd.f32 %v241, %v465
      %467 = vmatmul.bf16.gmra.mxu0 %v345
      %v468 = vpop.f32.mrf.mxu0
      %v469 = vadd.f32 %v241, %v468
      %v470 = vpop.f32.mrf.mxu0
      %v471 = vadd.f32 %v241, %v470
      %472 = vmatmul.bf16.gmra.mxu0 %v346
      %v473 = vpop.f32.mrf.mxu0
      %v474 = vadd.f32 %v241, %v473
      %v475 = vpop.f32.mrf.mxu0
      %v476 = vadd.f32 %v241, %v475
      %477 = vmatmul.bf16.gmra.mxu0 %v347
      %v478 = vpop.f32.mrf.mxu0
      %v479 = vadd.f32 %v241, %v478
      %v480 = vpop.f32.mrf.mxu0
      %v481 = vadd.f32 %v241, %v480
      %482 = vmatmul.bf16.gmra.mxu0 %v348
      %v483 = vpop.f32.mrf.mxu0
      %v484 = vadd.f32 %v241, %v483
      %v485 = vpop.f32.mrf.mxu0
      %v486 = vadd.f32 %v241, %v485
      %487 = vmatmul.bf16.gmra.mxu0 %v349
      %v488 = vpop.f32.mrf.mxu0
      %v489 = vadd.f32 %v241, %v488
      %v490 = vpop.f32.mrf.mxu0
      %v491 = vadd.f32 %v241, %v490
      %492 = vmatmul.bf16.gmra.mxu0 %v350
      %v493 = vpop.f32.mrf.mxu0
      %v494 = vadd.f32 %v241, %v493
      %v495 = vpop.f32.mrf.mxu0
      %v496 = vadd.f32 %v241, %v495
      %497 = vmatmul.bf16.gmra.mxu0 %v351
      %v498 = vpop.f32.mrf.mxu0
      %v499 = vadd.f32 %v241, %v498
      %v500 = vpop.f32.mrf.mxu0
      %v501 = vadd.f32 %v241, %v500
      %502 = vmatmul.bf16.gmra.mxu0 %v352
      %v503 = vpop.f32.mrf.mxu0
      %v504 = vadd.f32 %v241, %v503
      %v505 = vpop.f32.mrf.mxu0
      %v506 = vadd.f32 %v241, %v505
      %507 = vmatmul.bf16.gmra.mxu0 %v353
      %v508 = vpop.f32.mrf.mxu0
      %v509 = vadd.f32 %v241, %v508
      %v510 = vpop.f32.mrf.mxu0
      %v511 = vadd.f32 %v241, %v510
      %512 = vmatmul.bf16.gmra.mxu0 %v354
      %v513 = vpop.f32.mrf.mxu0
      %v514 = vadd.f32 %v241, %v513
      %v515 = vpop.f32.mrf.mxu0
      %v516 = vadd.f32 %v241, %v515
      %517 = vmatmul.bf16.gmra.mxu0 %v355
      %v518 = vpop.f32.mrf.mxu0
      %v519 = vadd.f32 %v241, %v518
      %v520 = vpop.f32.mrf.mxu0
      %v521 = vadd.f32 %v241, %v520
      %522 = vmatmul.bf16.gmra.mxu0 %v356
      %v523 = vpop.f32.mrf.mxu0
      %v524 = vadd.f32 %v241, %v523
      %v525 = vpop.f32.mrf.mxu0
      %v526 = vadd.f32 %v241, %v525
      %527 = vmatmul.bf16.gmra.mxu0 %v357
      %v528 = vpop.f32.mrf.mxu0
      %v529 = vadd.f32 %v241, %v528
      %v530 = vpop.f32.mrf.mxu0
      %v531 = vadd.f32 %v241, %v530
      %532 = vmatmul.bf16.gmra.mxu0 %v358
      %v533 = vpop.f32.mrf.mxu0
      %v534 = vadd.f32 %v241, %v533
      %v535 = vpop.f32.mrf.mxu0
      %v536 = vadd.f32 %v241, %v535
      %537 = vmatmul.bf16.gmra.mxu0 %v359
      %v538 = vpop.f32.mrf.mxu0
      %v539 = vadd.f32 %v241, %v538
      %v540 = vpop.f32.mrf.mxu0
      %v541 = vadd.f32 %v241, %v540
      %542 = vmatmul.bf16.gmra.mxu0 %v360
      %v543 = vpop.f32.mrf.mxu0
      %v544 = vadd.f32 %v241, %v543
      %v545 = vpop.f32.mrf.mxu0
      %v546 = vadd.f32 %v241, %v545
      %547 = vmatmul.bf16.gmra.mxu0 %v361
      %v548 = vpop.f32.mrf.mxu0
      %v549 = vadd.f32 %v241, %v548
      %v550 = vpop.f32.mrf.mxu0
      %v551 = vadd.f32 %v241, %v550
      %552 = vmatmul.bf16.gmra.mxu0 %v362
      %v553 = vpop.f32.mrf.mxu0
      %v554 = vadd.f32 %v241, %v553
      %v555 = vpop.f32.mrf.mxu0
      %v556 = vadd.f32 %v241, %v555
      %557 = vmatmul.bf16.gmra.mxu0 %v363
      %v558 = vpop.f32.mrf.mxu0
      %v559 = vadd.f32 %v241, %v558
      %v560 = vpop.f32.mrf.mxu0
      %v561 = vadd.f32 %v241, %v560
      %562 = vmatmul.bf16.gmra.mxu0 %v364
      %v563 = vpop.f32.mrf.mxu0
      %v564 = vadd.f32 %v241, %v563
      %v565 = vpop.f32.mrf.mxu0
      %v566 = vadd.f32 %v241, %v565
      %567 = vmatmul.bf16.gmra.mxu0 %v365
      %v568 = vpop.f32.mrf.mxu0
      %v569 = vadd.f32 %v241, %v568
      %v570 = vpop.f32.mrf.mxu0
      %571 = vdwg.mxu0
      %v572 = vtanh.pop %v449
      %v573 = vtanh.pop %v451
      %v574 = vtanh.pop %v454
      %v575 = vtanh.pop %v456
      %v576 = vtanh.pop %v459
      %v577 = vtanh.pop %v461
      %v578 = vtanh.pop %v464
      %v579 = vtanh.pop %v466
      %v580 = vtanh.pop %v469
      %v581 = vtanh.pop %v471
      %v582 = vtanh.pop %v474
      %v583 = vtanh.pop %v476
      %v584 = vtanh.pop %v479
      %v585 = vtanh.pop %v481
      %v586 = vtanh.pop %v484
      %v587 = vtanh.pop %v486
      %v588 = vtanh.pop %v489
      %v589 = vtanh.pop %v491
      %v590 = vtanh.pop %v494
      %v591 = vtanh.pop %v496
      %v592 = vtanh.pop %v499
      %v593 = vtanh.pop %v501
      %v594 = vtanh.pop %v504
      %v595 = vtanh.pop %v506
      %v596 = vtanh.pop %v509
      %v597 = vtanh.pop %v511
      %v598 = vtanh.pop %v514
      %v599 = vtanh.pop %v516
      %v600 = vtanh.pop %v519
      %v601 = vtanh.pop %v521
      %v602 = vtanh.pop %v524
      %v603 = vtanh.pop %v526
      %v604 = vtanh.pop %v529
      %v605 = vtanh.pop %v531
      %v606 = vtanh.pop %v534
      %v607 = vtanh.pop %v536
      %v608 = vtanh.pop %v539
      %v609 = vtanh.pop %v541
      %v610 = vtanh.pop %v544
      %v611 = vtanh.pop %v546
      %v612 = vtanh.pop %v549
      %v613 = vtanh.pop %v551
      %v614 = vtanh.pop %v554
      %v615 = vtanh.pop %v556
      %v616 = vtanh.pop %v559
      %v617 = vtanh.pop %v561
      %v618 = vtanh.pop %v564
      %v619 = vtanh.pop %v566
      %v620 = vtanh.pop %v569
      %621 = vst [vmem:[%s172] sm:$0xff] %v572
      %622 = vst [vmem:[%s172 + $0x8] sm:$0xff] %v573
      %623 = vst [vmem:[%s172 + $0x10] sm:$0xff] %v574
      %624 = vst [vmem:[%s172 + $0x18] sm:$0xff] %v575
      %625 = vst [vmem:[%s172 + $0x20] sm:$0xff] %v576
      %626 = vst [vmem:[%s172 + $0x28] sm:$0xff] %v577
      %627 = vst [vmem:[%s172 + $0x30] sm:$0xff] %v578
      %628 = vst [vmem:[%s172 + $0x38] sm:$0xff] %v579
      %629 = vst [vmem:[%s172 + $0x40] sm:$0xff] %v580
      %630 = vst [vmem:[%s172 + $0x48] sm:$0xff] %v581
      %631 = vst [vmem:[%s172 + $0x50] sm:$0xff] %v582
      %632 = vst [vmem:[%s172 + $0x58] sm:$0xff] %v583
      %633 = vst [vmem:[%s172 + $0x60] sm:$0xff] %v584
      %634 = vst [vmem:[%s172 + $0x68] sm:$0xff] %v585
      %635 = vst [vmem:[%s172 + $0x70] sm:$0xff] %v586
      %636 = vst [vmem:[%s172 + $0x78] sm:$0xff] %v587
      %637 = vst [vmem:[%s172 + $0x80] sm:$0xff] %v588
      %638 = vst [vmem:[%s172 + $0x88] sm:$0xff] %v589
      %639 = vst [vmem:[%s172 + $0x90] sm:$0xff] %v590
      %640 = vst [vmem:[%s172 + $0x98] sm:$0xff] %v591
      %641 = vst [vmem:[%s172 + $0xa0] sm:$0xff] %v592
      %642 = vst [vmem:[%s172 + $0xa8] sm:$0xff] %v593
      %643 = vst [vmem:[%s172 + $0xb0] sm:$0xff] %v594
      %644 = vst [vmem:[%s172 + $0xb8] sm:$0xff] %v595
      %645 = vst [vmem:[%s172 + $0xc0] sm:$0xff] %v596
      %646 = vst [vmem:[%s172 + $0xc8] sm:$0xff] %v597
      %647 = vst [vmem:[%s172 + $0xd0] sm:$0xff] %v598
      %648 = vst [vmem:[%s172 + $0xd8] sm:$0xff] %v599
      %649 = vst [vmem:[%s172 + $0xe0] sm:$0xff] %v600
      %650 = vst [vmem:[%s172 + $0xe8] sm:$0xff] %v601
      %651 = vst [vmem:[%s172 + $0xf0] sm:$0xff] %v602
      %652 = vst [vmem:[%s172 + $0xf8] sm:$0xff] %v603
      %653 = vst [vmem:[%s172 + $0x100] sm:$0xff] %v604
      %654 = vst [vmem:[%s172 + $0x108] sm:$0xff] %v605
      %655 = vst [vmem:[%s172 + $0x110] sm:$0xff] %v606
      %656 = vst [vmem:[%s172 + $0x118] sm:$0xff] %v607
      %657 = vst [vmem:[%s172 + $0x120] sm:$0xff] %v608
      %658 = vst [vmem:[%s172 + $0x128] sm:$0xff] %v609
      %659 = vst [vmem:[%s172 + $0x130] sm:$0xff] %v610
      %660 = vst [vmem:[%s172 + $0x138] sm:$0xff] %v611
      %661 = vst [vmem:[%s172 + $0x140] sm:$0xff] %v612
      %662 = vst [vmem:[%s172 + $0x148] sm:$0xff] %v613
      %663 = vst [vmem:[%s172 + $0x150] sm:$0xff] %v614
      %664 = vst [vmem:[%s172 + $0x158] sm:$0xff] %v615
      %665 = vst [vmem:[%s172 + $0x160] sm:$0xff] %v616
      %666 = vst [vmem:[%s172 + $0x168] sm:$0xff] %v617
      %667 = vst [vmem:[%s172 + $0x170] sm:$0xff] %v618
      %668 = vst [vmem:[%s172 + $0x178] sm:$0xff] %v619
      %669 = vst [vmem:[%s172 + $0x180] sm:$0xff] %v620
      %s670 = smul.u32 49, %s14
      %p671 = scmp.lt.s32.totalorder %s670, 195
      %s672 = scalar_select %p671, %s670, 195
      %s673 = smul.addr %s672, 8
      %s674 = scalar_lea.vmem %s3, %s673
      // Predicated region
      $region33: #{lenet_tanh_forward.3} parent=31 // pred_check
        %p675 = pneg %p100
      $region34: #{lenet_tanh_forward.3} parent=31 // pred_check_branch
        %677 = sbr.rel (%p675) target = $region36
      $region35: #{lenet_tanh_forward.3} parent=31 // pred_region
        %s678 = smul.u32 49, %s14
      $region36: #{lenet_tanh_forward.3} parent=31 // pred_fallthru
        _
    $region32: #{lenet_tanh_forward.3} parent=5 // pred_fallthru
      _
    %p679 = scmp.le.s32.totalorder 2, %s9
    // Predicated region
    $region37: #{lenet_tanh_forward.3} parent=5 // pred_check
      %p680 = pneg %p679
    $region38: #{lenet_tanh_forward.3} parent=5 // pred_check_branch
      %682 = sbr.rel (%p680) target = $region40
    $region39: #{lenet_tanh_forward.3} parent=5 // pred_region
      %s683 = ssub.s32 %s9, 2
      // Predicated region
      $region41: #{lenet_tanh_forward.3} parent=39 // pred_check
        %p684 = pneg %p106
      $region42: #{lenet_tanh_forward.3} parent=39 // pred_check_branch
        %686 = sbr.rel (%p684) target = $region44
      $region43: #{lenet_tanh_forward.3} parent=39 // pred_region
        %s687 = smul.u32 49, %s15
        %p688 = scmp.lt.s32.totalorder %s687, 195
        %s689 = scalar_select %p688, %s687, 195
        %s690 = smul.addr %s689, 8
        %s691 = scalar_lea.vmem %s3, %s690
      $region44: #{lenet_tanh_forward.3} parent=39 // pred_fallthru
        _
    $region40: #{lenet_tanh_forward.3} parent=5 // pred_fallthru
      _
  $region6: #{lenet_tanh_forward.3} parent=0 // loop_footer
    %s13 = sadd.s32 1, %s9
  $region7: #{lenet_tanh_forward.3} parent=0 // loop_footer_branch
    %8 = sbr.rel target = $region3
  $region8: #{lenet_tanh_forward.3} parent=0 // loop_exit
    _

// kernel: lenet_tanh_forward.4
$region0: #{lenet_tanh_forward.4}
  #allocation0 [shape = 'u32[]', space=smem, size = 0x4, offset = 0x4, fixed_abs, tag = 'smem constant byte address 0x4 - core index']
  #allocation1 [shape = 'u32[72,128]{1,0:T(1,128)}', space=vmem, size = 0x9000, scoped, tag = 'internal scratch']
  %s0 = inlined_call_operand.vmem [shape: bf16[200,256], index: 0, kind: input, shape index: {}]
  %s1 = inlined_call_operand.vmem [shape: bf16[256,128], index: 1, kind: input, shape index: {}]
  %s2 = inlined_call_operand.vmem [shape: f32[1,128], index: 2, kind: input, shape index: {}]
  %s3 = inlined_call_operand.vmem [shape: f32[200,128], index: 3, kind: output, shape index: {}]
  %s4 = sld [smem:[#allocation0]]
  $region22: #{lenet_tanh_forward.4} parent=0
    _
  %s6 = ssub.s32 1, %s4
  %s7 = scalar_select 0, %s6, %s4
  // Predicated region
  $region2: #{lenet_tanh_forward.4} parent=0 // pred_check
    _
  $region3: #{lenet_tanh_forward.4} parent=0 // pred_check_branch
    %9 = sbr.rel (0) target = $region5
  $region4: #{lenet_tanh_forward.4} parent=0 // pred_region
    _
  $region5: #{lenet_tanh_forward.4} parent=0 // pred_fallthru
    _
  // Predicated region
  $region6: #{lenet_tanh_forward.4} parent=0 // pred_check
    _
  $region7: #{lenet_tanh_forward.4} parent=0 // pred_check_branch
    %11 = sbr.rel (0) target = $region9
  $region8: #{lenet_tanh_forward.4} parent=0 // pred_region
    _
  $region9: #{lenet_tanh_forward.4} parent=0 // pred_fallthru
    _
  // Predicated region
  $region10: #{lenet_tanh_forward.4} parent=0 // pred_check
    _
  $region11: #{lenet_tanh_forward.4} parent=0 // pred_check_branch
    %13 = sbr.rel (0) target = $region13
  $region12: #{lenet_tanh_forward.4} parent=0 // pred_region
    _
  $region13: #{lenet_tanh_forward.4} parent=0 // pred_fallthru
    _
  %v14 = vld [vmem:[%s0] sm:$0xff]
  %v15 = vld [vmem:[%s0 + $0x8] sm:$0xff]
  %v16 = vld [vmem:[%s0 + $0x10] sm:$0xff]
  %v17 = vld [vmem:[%s0 + $0x18] sm:$0xff]
  %v18 = vld [vmem:[%s0 + $0x20] sm:$0xff]
  %v19 = vld [vmem:[%s0 + $0x28] sm:$0xff]
  %v20 = vld [vmem:[%s0 + $0x30] sm:$0xff]
  %v21 = vld [vmem:[%s0 + $0x38] sm:$0xff]
  %v22 = vld [vmem:[%s0 + $0x40] sm:$0xff]
  %v23 = vld [vmem:[%s0 + $0x48] sm:$0xff]
  %v24 = vld [vmem:[%s0 + $0x50] sm:$0xff]
  %v25 = vld [vmem:[%s0 + $0x58] sm:$0xff]
  %v26 = vld [vmem:[%s0 + $0x60] sm:$0xff]
  %v27 = vld [vmem:[%s0 + $0x68] sm:$0xff]
  %v28 = vld [vmem:[%s0 + $0x70] sm:$0xff]
  %v29 = vld [vmem:[%s0 + $0x78] sm:$0xff]
  %v30 = vld [vmem:[%s0 + $0x80] sm:$0xff]
  %v31 = vld [vmem:[%s0 + $0x88] sm:$0xff]
  %v32 = vld [vmem:[%s0 + $0x90] sm:$0xff]
  %v33 = vld [vmem:[%s0 + $0x98] sm:$0xff]
  %v34 = vld [vmem:[%s0 + $0xa0] sm:$0xff]
  %v35 = vld [vmem:[%s0 + $0xa8] sm:$0xff]
  %v36 = vld [vmem:[%s0 + $0xb0] sm:$0xff]
  %v37 = vld [vmem:[%s0 + $0xb8] sm:$0xff]
  %v38 = vld [vmem:[%s0 + $0xc0] sm:$0xff]
  %v39 = vld [vmem:[%s1] sm:$0xf]
  %v40 = vld [vmem:[%s1 + $0x4] sm:$0xf]
  %v41 = vld [vmem:[%s1 + $0x8] sm:$0xf]
  %v42 = vld [vmem:[%s1 + $0xc] sm:$0xf]
  %v43 = vld [vmem:[%s1 + $0x10] sm:$0xf]
  %v44 = vld [vmem:[%s1 + $0x14] sm:$0xf]
  %v45 = vld [vmem:[%s1 + $0x18] sm:$0xf]
  %v46 = vld [vmem:[%s1 + $0x1c] sm:$0xf]
  %v47 = vld [vmem:[%s1 + $0x20] sm:$0xf]
  %v48 = vld [vmem:[%s1 + $0x24] sm:$0xf]
  %v49 = vld [vmem:[%s1 + $0x28] sm:$0xf]
  %v50 = vld [vmem:[%s1 + $0x2c] sm:$0xf]
  %v51 = vld [vmem:[%s1 + $0x30] sm:$0xf]
  %v52 = vld [vmem:[%s1 + $0x34] sm:$0xf]
  %v53 = vld [vmem:[%s1 + $0x38] sm:$0xf]
  %v54 = vld [vmem:[%s1 + $0x3c] sm:$0xf]
  %v55 = vld [vmem:[%s1 + $0x40] sm:$0xf]
  %v56 = vld [vmem:[%s1 + $0x44] sm:$0xf]
  %v57 = vld [vmem:[%s1 + $0x48] sm:$0xf]
  %v58 = vld [vmem:[%s1 + $0x4c] sm:$0xf]
  %v59 = vld [vmem:[%s1 + $0x50] sm:$0xf]
  %v60 = vld [vmem:[%s1 + $0x54] sm:$0xf]
  %v61 = vld [vmem:[%s1 + $0x58] sm:$0xf]
  %v62 = vld [vmem:[%s1 + $0x5c] sm:$0xf]
  %v63 = vld [vmem:[%s1 + $0x60] sm:$0xf]
  %v64 = vld [vmem:[%s1 + $0x64] sm:$0xf]
  %v65 = vld [vmem:[%s1 + $0x68] sm:$0xf]
  %v66 = vld [vmem:[%s1 + $0x6c] sm:$0xf]
  %v67 = vld [vmem:[%s1 + $0x70] sm:$0xf]
  %v68 = vld [vmem:[%s1 + $0x74] sm:$0xf]
  %v69 = vld [vmem:[%s1 + $0x78] sm:$0xf]
  %v70 = vld [vmem:[%s1 + $0x7c] sm:$0xf]
  %v71 = vld [vmem:[%s2] sm:$0x1]
  %v73 = vperm.slane %v71, 0
  %v100 = vunpack.c.l.b16 %v14
  %v101 = vunpack.c.h.b16 %v14
  %v102 = vunpack.c.l.b16 %v15
  %v103 = vunpack.c.h.b16 %v15
  %v104 = vunpack.c.l.b16 %v16
  %v105 = vunpack.c.h.b16 %v16
  %v106 = vunpack.c.l.b16 %v17
  %v107 = vunpack.c.h.b16 %v17
  %v108 = vunpack.c.l.b16 %v18
  %v109 = vunpack.c.h.b16 %v18
  %v110 = vunpack.c.l.b16 %v19
  %v111 = vunpack.c.h.b16 %v19
  %v112 = vunpack.c.l.b16 %v20
  %v113 = vunpack.c.h.b16 %v20
  %v114 = vunpack.c.l.b16 %v21
  %v115 = vunpack.c.h.b16 %v21
  %v116 = vunpack.c.l.b16 %v22
  %v117 = vunpack.c.h.b16 %v22
  %v118 = vunpack.c.l.b16 %v23
  %v119 = vunpack.c.h.b16 %v23
  %v120 = vunpack.c.l.b16 %v24
  %v121 = vunpack.c.h.b16 %v24
  %v122 = vunpack.c.l.b16 %v25
  %v123 = vunpack.c.h.b16 %v25
  %v124 = vunpack.c.l.b16 %v26
  %v125 = vunpack.c.h.b16 %v26
  %v126 = vunpack.c.l.b16 %v27
  %v127 = vunpack.c.h.b16 %v27
  %v128 = vunpack.c.l.b16 %v28
  %v129 = vunpack.c.h.b16 %v28
  %v130 = vunpack.c.l.b16 %v29
  %v131 = vunpack.c.h.b16 %v29
  %v132 = vunpack.c.l.b16 %v30
  %v133 = vunpack.c.h.b16 %v30
  %v134 = vunpack.c.l.b16 %v31
  %v135 = vunpack.c.h.b16 %v31
  %v136 = vunpack.c.l.b16 %v32
  %v137 = vunpack.c.h.b16 %v32
  %v138 = vunpack.c.l.b16 %v33
  %v139 = vunpack.c.h.b16 %v33
  %v140 = vunpack.c.l.b16 %v34
  %v141 = vunpack.c.h.b16 %v34
  %v142 = vunpack.c.l.b16 %v35
  %v143 = vunpack.c.h.b16 %v35
  %v144 = vunpack.c.l.b16 %v36
  %v145 = vunpack.c.h.b16 %v36
  %v146 = vunpack.c.l.b16 %v37
  %v147 = vunpack.c.h.b16 %v37
  %v148 = vunpack.c.l.b16 %v38
  %v149 = vunpack.c.h.b16 %v38
  %v150 = vpack.c.b16 %v102, %v100
  %v151 = vpack.c.b16 %v103, %v101
  %v152 = vpack.c.b16 %v106, %v104
  %v153 = vpack.c.b16 %v107, %v105
  %v154 = vpack.c.b16 %v110, %v108
  %v155 = vpack.c.b16 %v111, %v109
  %v156 = vpack.c.b16 %v114, %v112
  %v157 = vpack.c.b16 %v115, %v113
  %v158 = vpack.c.b16 %v118, %v116
  %v159 = vpack.c.b16 %v119, %v117
  %v160 = vpack.c.b16 %v122, %v120
  %v161 = vpack.c.b16 %v123, %v121
  %v162 = vpack.c.b16 %v126, %v124
  %v163 = vpack.c.b16 %v127, %v125
  %v164 = vpack.c.b16 %v130, %v128
  %v165 = vpack.c.b16 %v131, %v129
  %v166 = vpack.c.b16 %v134, %v132
  %v167 = vpack.c.b16 %v135, %v133
  %v168 = vpack.c.b16 %v138, %v136
  %v169 = vpack.c.b16 %v139, %v137
  %v170 = vpack.c.b16 %v142, %v140
  %v171 = vpack.c.b16 %v143, %v141
  %v172 = vpack.c.b16 %v146, %v144
  %v173 = vpack.c.b16 %v147, %v145
  %v174 = vpack.c.b16 %v148, %v148
  %v175 = vpack.c.b16 %v149, %v149
  %v234 = vunpack.c.l.b16 %v39
  %v235 = vunpack.c.l.b16 %v40
  %v236 = vunpack.c.l.b16 %v41
  %v237 = vunpack.c.l.b16 %v42
  %v238 = vunpack.c.l.b16 %v43
  %v239 = vunpack.c.l.b16 %v44
  %v240 = vunpack.c.l.b16 %v45
  %v241 = vunpack.c.l.b16 %v46
  %v242 = vunpack.c.l.b16 %v47
  %v243 = vunpack.c.l.b16 %v48
  %v244 = vunpack.c.l.b16 %v49
  %v245 = vunpack.c.l.b16 %v50
  %v246 = vunpack.c.l.b16 %v51
  %v247 = vunpack.c.l.b16 %v52
  %v248 = vunpack.c.l.b16 %v53
  %v249 = vunpack.c.l.b16 %v54
  %v250 = vunpack.c.l.b16 %v55
  %v251 = vunpack.c.l.b16 %v56
  %v252 = vunpack.c.l.b16 %v57
  %v253 = vunpack.c.l.b16 %v58
  %v254 = vunpack.c.l.b16 %v59
  %v255 = vunpack.c.l.b16 %v60
  %v256 = vunpack.c.l.b16 %v61
  %v257 = vunpack.c.l.b16 %v62
  %v258 = vunpack.c.l.b16 %v63
  %v259 = vunpack.c.l.b16 %v64
  %v260 = vunpack.c.l.b16 %v65
  %v261 = vunpack.c.l.b16 %v66
  %v262 = vunpack.c.l.b16 %v67
  %v263 = vunpack.c.l.b16 %v68
  %v264 = vunpack.c.l.b16 %v69
  %v265 = vunpack.c.l.b16 %v70
  %v266 = vpack.c.b16 %v235, %v234
  %v267 = vpack.c.b16 %v237, %v236
  %v268 = vpack.c.b16 %v239, %v238
  %v269 = vpack.c.b16 %v241, %v240
  %v270 = vpack.c.b16 %v243, %v242
  %v271 = vpack.c.b16 %v245, %v244
  %v272 = vpack.c.b16 %v247, %v246
  %v273 = vpack.c.b16 %v249, %v248
  %v274 = vpack.c.b16 %v251, %v250
  %v275 = vpack.c.b16 %v253, %v252
  %v276 = vpack.c.b16 %v255, %v254
  %v277 = vpack.c.b16 %v257, %v256
  %v278 = vpack.c.b16 %v259, %v258
  %v279 = vpack.c.b16 %v261, %v260
  %v280 = vpack.c.b16 %v263, %v262
  %v281 = vpack.c.b16 %v265, %v264
  %298 = vmatpush.bf16.msra.mxu0 %v273
  %299 = vmatpush.bf16.msra.mxu0 %v272
  %300 = vmatpush.bf16.msra.mxu0 %v271
  %301 = vmatpush.bf16.msra.mxu0 %v270
  %302 = vmatpush.bf16.msra.mxu0 %v269
  %303 = vmatpush.bf16.msra.mxu0 %v268
  %304 = vmatpush.bf16.msra.mxu0 %v267
  %305 = vmatpush.bf16.msra.mxu0 %v266
  %306 = vmatmul.bf16.gmra.mxu0 %v150
  %v307 = vpop.f32.mrf.mxu0
  %v308 = vadd.f32 %v73, %v307
  %v309 = vpop.f32.mrf.mxu0
  %v310 = vadd.f32 %v73, %v309
  %311 = vmatmul.bf16.gmra.mxu0 %v152
  %v312 = vpop.f32.mrf.mxu0
  %v313 = vadd.f32 %v73, %v312
  %v314 = vpop.f32.mrf.mxu0
  %v315 = vadd.f32 %v73, %v314
  %316 = vmatmul.bf16.gmra.mxu0 %v154
  %v317 = vpop.f32.mrf.mxu0
  %v318 = vadd.f32 %v73, %v317
  %v319 = vpop.f32.mrf.mxu0
  %v320 = vadd.f32 %v73, %v319
  %321 = vmatmul.bf16.gmra.mxu0 %v156
  %v322 = vpop.f32.mrf.mxu0
  %v323 = vadd.f32 %v73, %v322
  %v324 = vpop.f32.mrf.mxu0
  %v325 = vadd.f32 %v73, %v324
  %326 = vmatmul.bf16.gmra.mxu0 %v158
  %v327 = vpop.f32.mrf.mxu0
  %v328 = vadd.f32 %v73, %v327
  %v329 = vpop.f32.mrf.mxu0
  %v330 = vadd.f32 %v73, %v329
  %331 = vmatmul.bf16.gmra.mxu0 %v160
  %v332 = vpop.f32.mrf.mxu0
  %v333 = vadd.f32 %v73, %v332
  %v334 = vpop.f32.mrf.mxu0
  %v335 = vadd.f32 %v73, %v334
  %336 = vmatmul.bf16.gmra.mxu0 %v162
  %v337 = vpop.f32.mrf.mxu0
  %v338 = vadd.f32 %v73, %v337
  %v339 = vpop.f32.mrf.mxu0
  %v340 = vadd.f32 %v73, %v339
  %341 = vmatmul.bf16.gmra.mxu0 %v164
  %v342 = vpop.f32.mrf.mxu0
  %v343 = vadd.f32 %v73, %v342
  %v344 = vpop.f32.mrf.mxu0
  %v345 = vadd.f32 %v73, %v344
  %346 = vmatmul.bf16.gmra.mxu0 %v166
  %v347 = vpop.f32.mrf.mxu0
  %v348 = vadd.f32 %v73, %v347
  %v349 = vpop.f32.mrf.mxu0
  %v350 = vadd.f32 %v73, %v349
  %351 = vmatmul.bf16.gmra.mxu0 %v168
  %v352 = vpop.f32.mrf.mxu0
  %v353 = vadd.f32 %v73, %v352
  %v354 = vpop.f32.mrf.mxu0
  %v355 = vadd.f32 %v73, %v354
  %356 = vmatmul.bf16.gmra.mxu0 %v170
  %v357 = vpop.f32.mrf.mxu0
  %v358 = vadd.f32 %v73, %v357
  %v359 = vpop.f32.mrf.mxu0
  %v360 = vadd.f32 %v73, %v359
  %361 = vmatmul.bf16.gmra.mxu0 %v172
  %v362 = vpop.f32.mrf.mxu0
  %v363 = vadd.f32 %v73, %v362
  %v364 = vpop.f32.mrf.mxu0
  %v365 = vadd.f32 %v73, %v364
  %366 = vmatmul.bf16.gmra.mxu0 %v174
  %v367 = vpop.f32.mrf.mxu0
  %v368 = vadd.f32 %v73, %v367
  %v369 = vpop.f32.mrf.mxu0
  %370 = vdwg.mxu0
  %371 = vmatpush.bf16.msra.mxu0 %v281
  %372 = vmatpush.bf16.msra.mxu0 %v280
  %373 = vmatpush.bf16.msra.mxu0 %v279
  %374 = vmatpush.bf16.msra.mxu0 %v278
  %375 = vmatpush.bf16.msra.mxu0 %v277
  %376 = vmatpush.bf16.msra.mxu0 %v276
  %377 = vmatpush.bf16.msra.mxu0 %v275
  %378 = vmatpush.bf16.msra.mxu0 %v274
  %379 = vmatmul.bf16.gmra.mxu0 %v151
  %v380 = vpop.f32.mrf.mxu0
  %v381 = vadd.f32 %v308, %v380
  %v382 = vpop.f32.mrf.mxu0
  %v383 = vadd.f32 %v310, %v382
  %384 = vmatmul.bf16.gmra.mxu0 %v153
  %v385 = vpop.f32.mrf.mxu0
  %v386 = vadd.f32 %v313, %v385
  %v387 = vpop.f32.mrf.mxu0
  %v388 = vadd.f32 %v315, %v387
  %389 = vmatmul.bf16.gmra.mxu0 %v155
  %v390 = vpop.f32.mrf.mxu0
  %v391 = vadd.f32 %v318, %v390
  %v392 = vpop.f32.mrf.mxu0
  %v393 = vadd.f32 %v320, %v392
  %394 = vmatmul.bf16.gmra.mxu0 %v157
  %v395 = vpop.f32.mrf.mxu0
  %v396 = vadd.f32 %v323, %v395
  %v397 = vpop.f32.mrf.mxu0
  %v398 = vadd.f32 %v325, %v397
  %399 = vmatmul.bf16.gmra.mxu0 %v159
  %v400 = vpop.f32.mrf.mxu0
  %v401 = vadd.f32 %v328, %v400
  %v402 = vpop.f32.mrf.mxu0
  %v403 = vadd.f32 %v330, %v402
  %404 = vmatmul.bf16.gmra.mxu0 %v161
  %v405 = vpop.f32.mrf.mxu0
  %v406 = vadd.f32 %v333, %v405
  %v407 = vpop.f32.mrf.mxu0
  %v408 = vadd.f32 %v335, %v407
  %409 = vmatmul.bf16.gmra.mxu0 %v163
  %v410 = vpop.f32.mrf.mxu0
  %v411 = vadd.f32 %v338, %v410
  %v412 = vpop.f32.mrf.mxu0
  %v413 = vadd.f32 %v340, %v412
  %414 = vmatmul.bf16.gmra.mxu0 %v165
  %v415 = vpop.f32.mrf.mxu0
  %v416 = vadd.f32 %v343, %v415
  %v417 = vpop.f32.mrf.mxu0
  %v418 = vadd.f32 %v345, %v417
  %419 = vmatmul.bf16.gmra.mxu0 %v167
  %v420 = vpop.f32.mrf.mxu0
  %v421 = vadd.f32 %v348, %v420
  %v422 = vpop.f32.mrf.mxu0
  %v423 = vadd.f32 %v350, %v422
  %424 = vmatmul.bf16.gmra.mxu0 %v169
  %v425 = vpop.f32.mrf.mxu0
  %v426 = vadd.f32 %v353, %v425
  %v427 = vpop.f32.mrf.mxu0
  %v428 = vadd.f32 %v355, %v427
  %429 = vmatmul.bf16.gmra.mxu0 %v171
  %v430 = vpop.f32.mrf.mxu0
  %v431 = vadd.f32 %v358, %v430
  %v432 = vpop.f32.mrf.mxu0
  %v433 = vadd.f32 %v360, %v432
  %434 = vmatmul.bf16.gmra.mxu0 %v173
  %v435 = vpop.f32.mrf.mxu0
  %v436 = vadd.f32 %v363, %v435
  %v437 = vpop.f32.mrf.mxu0
  %v438 = vadd.f32 %v365, %v437
  %439 = vmatmul.bf16.gmra.mxu0 %v175
  %v440 = vpop.f32.mrf.mxu0
  %v441 = vadd.f32 %v368, %v440
  %v442 = vpop.f32.mrf.mxu0
  %443 = vdwg.mxu0
  %v444 = vtanh.pop %v381
  %v445 = vtanh.pop %v383
  %v446 = vtanh.pop %v386
  %v447 = vtanh.pop %v388
  %v448 = vtanh.pop %v391
  %v449 = vtanh.pop %v393
  %v450 = vtanh.pop %v396
  %v451 = vtanh.pop %v398
  %v452 = vtanh.pop %v401
  %v453 = vtanh.pop %v403
  %v454 = vtanh.pop %v406
  %v455 = vtanh.pop %v408
  %v456 = vtanh.pop %v411
  %v457 = vtanh.pop %v413
  %v458 = vtanh.pop %v416
  %v459 = vtanh.pop %v418
  %v460 = vtanh.pop %v421
  %v461 = vtanh.pop %v423
  %v462 = vtanh.pop %v426
  %v463 = vtanh.pop %v428
  %v464 = vtanh.pop %v431
  %v465 = vtanh.pop %v433
  %v466 = vtanh.pop %v436
  %v467 = vtanh.pop %v438
  %v468 = vtanh.pop %v441
  %469 = vst [vmem:[%s3] sm:$0xff] %v444
  %470 = vst [vmem:[%s3 + $0x8] sm:$0xff] %v445
  %471 = vst [vmem:[%s3 + $0x10] sm:$0xff] %v446
  %472 = vst [vmem:[%s3 + $0x18] sm:$0xff] %v447
  %473 = vst [vmem:[%s3 + $0x20] sm:$0xff] %v448
  %474 = vst [vmem:[%s3 + $0x28] sm:$0xff] %v449
  %475 = vst [vmem:[%s3 + $0x30] sm:$0xff] %v450
  %476 = vst [vmem:[%s3 + $0x38] sm:$0xff] %v451
  %477 = vst [vmem:[%s3 + $0x40] sm:$0xff] %v452
  %478 = vst [vmem:[%s3 + $0x48] sm:$0xff] %v453
  %479 = vst [vmem:[%s3 + $0x50] sm:$0xff] %v454
  %480 = vst [vmem:[%s3 + $0x58] sm:$0xff] %v455
  %481 = vst [vmem:[%s3 + $0x60] sm:$0xff] %v456
  %482 = vst [vmem:[%s3 + $0x68] sm:$0xff] %v457
  %483 = vst [vmem:[%s3 + $0x70] sm:$0xff] %v458
  %484 = vst [vmem:[%s3 + $0x78] sm:$0xff] %v459
  %485 = vst [vmem:[%s3 + $0x80] sm:$0xff] %v460
  %486 = vst [vmem:[%s3 + $0x88] sm:$0xff] %v461
  %487 = vst [vmem:[%s3 + $0x90] sm:$0xff] %v462
  %488 = vst [vmem:[%s3 + $0x98] sm:$0xff] %v463
  %489 = vst [vmem:[%s3 + $0xa0] sm:$0xff] %v464
  %490 = vst [vmem:[%s3 + $0xa8] sm:$0xff] %v465
  %491 = vst [vmem:[%s3 + $0xb0] sm:$0xff] %v466
  %492 = vst [vmem:[%s3 + $0xb8] sm:$0xff] %v467
  %493 = vst [vmem:[%s3 + $0xc0] sm:$0xff] %v468
  // Predicated region
  $region14: #{lenet_tanh_forward.4} parent=0 // pred_check
    _
  $region15: #{lenet_tanh_forward.4} parent=0 // pred_check_branch
    %495 = sbr.rel (0) target = $region17
  $region16: #{lenet_tanh_forward.4} parent=0 // pred_region
    _
  $region17: #{lenet_tanh_forward.4} parent=0 // pred_fallthru
    _
  // Predicated region
  $region18: #{lenet_tanh_forward.4} parent=0 // pred_check
    _
  $region19: #{lenet_tanh_forward.4} parent=0 // pred_check_branch
    %497 = sbr.rel (0) target = $region21
  $region20: #{lenet_tanh_forward.4} parent=0 // pred_region
    _
  $region21: #{lenet_tanh_forward.4} parent=0 // pred_fallthru
    _

// kernel: lenet_tanh_forward.5
$region0: #{lenet_tanh_forward.5}
  #allocation0 [shape = 'u32[]', space=smem, size = 0x4, offset = 0x4, fixed_abs, tag = 'smem constant byte address 0x4 - core index']
  #allocation1 [shape = 'u32[72,128]{1,0:T(1,128)}', space=vmem, size = 0x9000, scoped, tag = 'internal scratch']
  %s0 = inlined_call_operand.vmem [shape: bf16[8,512], index: 0, kind: input, shape index: {}]
  %s1 = inlined_call_operand.vmem [shape: bf16[512,128], index: 1, kind: input, shape index: {}]
  %s2 = inlined_call_operand.vmem [shape: f32[1,128], index: 2, kind: input, shape index: {}]
  %s3 = inlined_call_operand.vmem [shape: bf16[128,128], index: 3, kind: input, shape index: {}]
  %s4 = inlined_call_operand.vmem [shape: f32[1,128], index: 4, kind: input, shape index: {}]
  %s5 = inlined_call_operand.vmem [shape: bf16[128,128], index: 5, kind: input, shape index: {}]
  %s6 = inlined_call_operand.vmem [shape: f32[1,128], index: 6, kind: input, shape index: {}]
  %s7 = inlined_call_operand.vmem [shape: f32[8,128], index: 7, kind: output, shape index: {}]
  %s8 = sld [smem:[#allocation0]]
  $region38: #{lenet_tanh_forward.5} parent=0
    _
  %s10 = ssub.s32 1, %s8
  %s11 = scalar_select 0, %s10, %s8
  // Predicated region
  $region2: #{lenet_tanh_forward.5} parent=0 // pred_check
    _
  $region3: #{lenet_tanh_forward.5} parent=0 // pred_check_branch
    %13 = sbr.rel (0) target = $region5
  $region4: #{lenet_tanh_forward.5} parent=0 // pred_region
    _
  $region5: #{lenet_tanh_forward.5} parent=0 // pred_fallthru
    _
  // Predicated region
  $region6: #{lenet_tanh_forward.5} parent=0 // pred_check
    _
  $region7: #{lenet_tanh_forward.5} parent=0 // pred_check_branch
    %15 = sbr.rel (0) target = $region9
  $region8: #{lenet_tanh_forward.5} parent=0 // pred_region
    _
  $region9: #{lenet_tanh_forward.5} parent=0 // pred_fallthru
    _
  // Predicated region
  $region10: #{lenet_tanh_forward.5} parent=0 // pred_check
    _
  $region11: #{lenet_tanh_forward.5} parent=0 // pred_check_branch
    %17 = sbr.rel (0) target = $region13
  $region12: #{lenet_tanh_forward.5} parent=0 // pred_region
    _
  $region13: #{lenet_tanh_forward.5} parent=0 // pred_fallthru
    _
  // Predicated region
  $region14: #{lenet_tanh_forward.5} parent=0 // pred_check
    _
  $region15: #{lenet_tanh_forward.5} parent=0 // pred_check_branch
    %19 = sbr.rel (0) target = $region17
  $region16: #{lenet_tanh_forward.5} parent=0 // pred_region
    _
  $region17: #{lenet_tanh_forward.5} parent=0 // pred_fallthru
    _
  // Predicated region
  $region18: #{lenet_tanh_forward.5} parent=0 // pred_check
    _
  $region19: #{lenet_tanh_forward.5} parent=0 // pred_check_branch
    %21 = sbr.rel (0) target = $region21
  $region20: #{lenet_tanh_forward.5} parent=0 // pred_region
    _
  $region21: #{lenet_tanh_forward.5} parent=0 // pred_fallthru
    _
  // Predicated region
  $region22: #{lenet_tanh_forward.5} parent=0 // pred_check
    _
  $region23: #{lenet_tanh_forward.5} parent=0 // pred_check_branch
    %23 = sbr.rel (0) target = $region25
  $region24: #{lenet_tanh_forward.5} parent=0 // pred_region
    _
  $region25: #{lenet_tanh_forward.5} parent=0 // pred_fallthru
    _
  // Predicated region
  $region26: #{lenet_tanh_forward.5} parent=0 // pred_check
    _
  $region27: #{lenet_tanh_forward.5} parent=0 // pred_check_branch
    %25 = sbr.rel (0) target = $region29
  $region28: #{lenet_tanh_forward.5} parent=0 // pred_region
    _
  $region29: #{lenet_tanh_forward.5} parent=0 // pred_fallthru
    _
  %v26 = vld [vmem:[%s0] sm:$0xff]
  %v27 = vld [vmem:[%s0 + $0x8] sm:$0xff]
  %v28 = vld [vmem:[%s1] sm:$0xf]
  %v29 = vld [vmem:[%s1 + $0x4] sm:$0xf]
  %v30 = vld [vmem:[%s1 + $0x8] sm:$0xf]
  %v31 = vld [vmem:[%s1 + $0xc] sm:$0xf]
  %v32 = vld [vmem:[%s1 + $0x10] sm:$0xf]
  %v33 = vld [vmem:[%s1 + $0x14] sm:$0xf]
  %v34 = vld [vmem:[%s1 + $0x18] sm:$0xf]
  %v35 = vld [vmem:[%s1 + $0x1c] sm:$0xf]
  %v36 = vld [vmem:[%s1 + $0x20] sm:$0xf]
  %v37 = vld [vmem:[%s1 + $0x24] sm:$0xf]
  %v38 = vld [vmem:[%s1 + $0x28] sm:$0xf]
  %v39 = vld [vmem:[%s1 + $0x2c] sm:$0xf]
  %v40 = vld [vmem:[%s1 + $0x30] sm:$0xf]
  %v41 = vld [vmem:[%s1 + $0x34] sm:$0xf]
  %v42 = vld [vmem:[%s1 + $0x38] sm:$0xf]
  %v43 = vld [vmem:[%s1 + $0x3c] sm:$0xf]
  %v44 = vld [vmem:[%s1 + $0x40] sm:$0xf]
  %v45 = vld [vmem:[%s1 + $0x44] sm:$0xf]
  %v46 = vld [vmem:[%s1 + $0x48] sm:$0xf]
  %v47 = vld [vmem:[%s1 + $0x4c] sm:$0xf]
  %v48 = vld [vmem:[%s1 + $0x50] sm:$0xf]
  %v49 = vld [vmem:[%s1 + $0x54] sm:$0xf]
  %v50 = vld [vmem:[%s1 + $0x58] sm:$0xf]
  %v51 = vld [vmem:[%s1 + $0x5c] sm:$0xf]
  %v52 = vld [vmem:[%s1 + $0x60] sm:$0xf]
  %v53 = vld [vmem:[%s1 + $0x64] sm:$0xf]
  %v54 = vld [vmem:[%s1 + $0x68] sm:$0xf]
  %v55 = vld [vmem:[%s1 + $0x6c] sm:$0xf]
  %v56 = vld [vmem:[%s1 + $0x70] sm:$0xf]
  %v57 = vld [vmem:[%s1 + $0x74] sm:$0xf]
  %v58 = vld [vmem:[%s1 + $0x78] sm:$0xf]
  %v59 = vld [vmem:[%s1 + $0x7c] sm:$0xf]
  %v60 = vld [vmem:[%s1 + $0x80] sm:$0xf]
  %v61 = vld [vmem:[%s1 + $0x84] sm:$0xf]
  %v62 = vld [vmem:[%s1 + $0x88] sm:$0xf]
  %v63 = vld [vmem:[%s1 + $0x8c] sm:$0xf]
  %v64 = vld [vmem:[%s1 + $0x90] sm:$0xf]
  %v65 = vld [vmem:[%s1 + $0x94] sm:$0xf]
  %v66 = vld [vmem:[%s1 + $0x98] sm:$0xf]
  %v67 = vld [vmem:[%s1 + $0x9c] sm:$0xf]
  %v68 = vld [vmem:[%s1 + $0xa0] sm:$0xf]
  %v69 = vld [vmem:[%s1 + $0xa4] sm:$0xf]
  %v70 = vld [vmem:[%s1 + $0xa8] sm:$0xf]
  %v71 = vld [vmem:[%s1 + $0xac] sm:$0xf]
  %v72 = vld [vmem:[%s1 + $0xb0] sm:$0xf]
  %v73 = vld [vmem:[%s1 + $0xb4] sm:$0xf]
  %v74 = vld [vmem:[%s1 + $0xb8] sm:$0xf]
  %v75 = vld [vmem:[%s1 + $0xbc] sm:$0xf]
  %v76 = vld [vmem:[%s1 + $0xc0] sm:$0xf]
  %v77 = vld [vmem:[%s1 + $0xc4] sm:$0xf]
  %v78 = vld [vmem:[%s1 + $0xc8] sm:$0xf]
  %v79 = vld [vmem:[%s1 + $0xcc] sm:$0xf]
  %v80 = vld [vmem:[%s1 + $0xd0] sm:$0xf]
  %v81 = vld [vmem:[%s1 + $0xd4] sm:$0xf]
  %v82 = vld [vmem:[%s1 + $0xd8] sm:$0xf]
  %v83 = vld [vmem:[%s1 + $0xdc] sm:$0xf]
  %v84 = vld [vmem:[%s1 + $0xe0] sm:$0xf]
  %v85 = vld [vmem:[%s1 + $0xe4] sm:$0xf]
  %v86 = vld [vmem:[%s1 + $0xe8] sm:$0xf]
  %v87 = vld [vmem:[%s1 + $0xec] sm:$0xf]
  %v88 = vld [vmem:[%s1 + $0xf0] sm:$0xf]
  %v89 = vld [vmem:[%s1 + $0xf4] sm:$0xf]
  %v90 = vld [vmem:[%s1 + $0xf8] sm:$0xf]
  %v91 = vld [vmem:[%s1 + $0xfc] sm:$0xf]
  %v92 = vld [vmem:[%s2] sm:$0x1]
  %v94 = vperm.slane %v92, 0
  %v98 = vunpack.c.l.b16 %v26
  %v99 = vunpack.c.h.b16 %v26
  %v100 = vunpack.c.l.b16 %v27
  %v101 = vunpack.c.h.b16 %v27
  %v102 = vpack.c.b16 %v98, %v98
  %v103 = vpack.c.b16 %v99, %v99
  %v104 = vpack.c.b16 %v100, %v100
  %v105 = vpack.c.b16 %v101, %v101
  %v174 = vunpack.c.l.b16 %v28
  %v175 = vunpack.c.l.b16 %v29
  %v176 = vunpack.c.l.b16 %v30
  %v177 = vunpack.c.l.b16 %v31
  %v178 = vunpack.c.l.b16 %v32
  %v179 = vunpack.c.l.b16 %v33
  %v180 = vunpack.c.l.b16 %v34
  %v181 = vunpack.c.l.b16 %v35
  %v182 = vunpack.c.l.b16 %v36
  %v183 = vunpack.c.l.b16 %v37
  %v184 = vunpack.c.l.b16 %v38
  %v185 = vunpack.c.l.b16 %v39
  %v186 = vunpack.c.l.b16 %v40
  %v187 = vunpack.c.l.b16 %v41
  %v188 = vunpack.c.l.b16 %v42
  %v189 = vunpack.c.l.b16 %v43
  %v190 = vunpack.c.l.b16 %v44
  %v191 = vunpack.c.l.b16 %v45
  %v192 = vunpack.c.l.b16 %v46
  %v193 = vunpack.c.l.b16 %v47
  %v194 = vunpack.c.l.b16 %v48
  %v195 = vunpack.c.l.b16 %v49
  %v196 = vunpack.c.l.b16 %v50
  %v197 = vunpack.c.l.b16 %v51
  %v198 = vunpack.c.l.b16 %v52
  %v199 = vunpack.c.l.b16 %v53
  %v200 = vunpack.c.l.b16 %v54
  %v201 = vunpack.c.l.b16 %v55
  %v202 = vunpack.c.l.b16 %v56
  %v203 = vunpack.c.l.b16 %v57
  %v204 = vunpack.c.l.b16 %v58
  %v205 = vunpack.c.l.b16 %v59
  %v206 = vunpack.c.l.b16 %v60
  %v207 = vunpack.c.l.b16 %v61
  %v208 = vunpack.c.l.b16 %v62
  %v209 = vunpack.c.l.b16 %v63
  %v210 = vunpack.c.l.b16 %v64
  %v211 = vunpack.c.l.b16 %v65
  %v212 = vunpack.c.l.b16 %v66
  %v213 = vunpack.c.l.b16 %v67
  %v214 = vunpack.c.l.b16 %v68
  %v215 = vunpack.c.l.b16 %v69
  %v216 = vunpack.c.l.b16 %v70
  %v217 = vunpack.c.l.b16 %v71
  %v218 = vunpack.c.l.b16 %v72
  %v219 = vunpack.c.l.b16 %v73
  %v220 = vunpack.c.l.b16 %v74
  %v221 = vunpack.c.l.b16 %v75
  %v222 = vunpack.c.l.b16 %v76
  %v223 = vunpack.c.l.b16 %v77
  %v224 = vunpack.c.l.b16 %v78
  %v225 = vunpack.c.l.b16 %v79
  %v226 = vunpack.c.l.b16 %v80
  %v227 = vunpack.c.l.b16 %v81
  %v228 = vunpack.c.l.b16 %v82
  %v229 = vunpack.c.l.b16 %v83
  %v230 = vunpack.c.l.b16 %v84
  %v231 = vunpack.c.l.b16 %v85
  %v232 = vunpack.c.l.b16 %v86
  %v233 = vunpack.c.l.b16 %v87
  %v234 = vunpack.c.l.b16 %v88
  %v235 = vunpack.c.l.b16 %v89
  %v236 = vunpack.c.l.b16 %v90
  %v237 = vunpack.c.l.b16 %v91
  %v238 = vpack.c.b16 %v175, %v174
  %v239 = vpack.c.b16 %v177, %v176
  %v240 = vpack.c.b16 %v179, %v178
  %v241 = vpack.c.b16 %v181, %v180
  %v242 = vpack.c.b16 %v183, %v182
  %v243 = vpack.c.b16 %v185, %v184
  %v244 = vpack.c.b16 %v187, %v186
  %v245 = vpack.c.b16 %v189, %v188
  %v246 = vpack.c.b16 %v191, %v190
  %v247 = vpack.c.b16 %v193, %v192
  %v248 = vpack.c.b16 %v195, %v194
  %v249 = vpack.c.b16 %v197, %v196
  %v250 = vpack.c.b16 %v199, %v198
  %v251 = vpack.c.b16 %v201, %v200
  %v252 = vpack.c.b16 %v203, %v202
  %v253 = vpack.c.b16 %v205, %v204
  %v254 = vpack.c.b16 %v207, %v206
  %v255 = vpack.c.b16 %v209, %v208
  %v256 = vpack.c.b16 %v211, %v210
  %v257 = vpack.c.b16 %v213, %v212
  %v258 = vpack.c.b16 %v215, %v214
  %v259 = vpack.c.b16 %v217, %v216
  %v260 = vpack.c.b16 %v219, %v218
  %v261 = vpack.c.b16 %v221, %v220
  %v262 = vpack.c.b16 %v223, %v222
  %v263 = vpack.c.b16 %v225, %v224
  %v264 = vpack.c.b16 %v227, %v226
  %v265 = vpack.c.b16 %v229, %v228
  %v266 = vpack.c.b16 %v231, %v230
  %v267 = vpack.c.b16 %v233, %v232
  %v268 = vpack.c.b16 %v235, %v234
  %v269 = vpack.c.b16 %v237, %v236
  %302 = vmatpush.bf16.msra.mxu0 %v245
  %303 = vmatpush.bf16.msra.mxu0 %v244
  %304 = vmatpush.bf16.msra.mxu0 %v243
  %305 = vmatpush.bf16.msra.mxu0 %v242
  %306 = vmatpush.bf16.msra.mxu0 %v241
  %307 = vmatpush.bf16.msra.mxu0 %v240
  %308 = vmatpush.bf16.msra.mxu0 %v239
  %309 = vmatpush.bf16.msra.mxu0 %v238
  %310 = vmatmul.bf16.gmra.mxu0 %v102
  %v311 = vpop.f32.mrf.mxu0
  %v312 = vadd.f32 %v94, %v311
  %v313 = vpop.f32.mrf.mxu0
  %314 = vdwg.mxu0
  %315 = vmatpush.bf16.msra.mxu0 %v253
  %316 = vmatpush.bf16.msra.mxu0 %v252
  %317 = vmatpush.bf16.msra.mxu0 %v251
  %318 = vmatpush.bf16.msra.mxu0 %v250
  %319 = vmatpush.bf16.msra.mxu0 %v249
  %320 = vmatpush.bf16.msra.mxu0 %v248
  %321 = vmatpush.bf16.msra.mxu0 %v247
  %322 = vmatpush.bf16.msra.mxu0 %v246
  %323 = vmatmul.bf16.gmra.mxu0 %v103
  %v324 = vpop.f32.mrf.mxu0
  %v325 = vadd.f32 %v312, %v324
  %v326 = vpop.f32.mrf.mxu0
  %327 = vdwg.mxu0
  %328 = vmatpush.bf16.msra.mxu0 %v261
  %329 = vmatpush.bf16.msra.mxu0 %v260
  %330 = vmatpush.bf16.msra.mxu0 %v259
  %331 = vmatpush.bf16.msra.mxu0 %v258
  %332 = vmatpush.bf16.msra.mxu0 %v257
  %333 = vmatpush.bf16.msra.mxu0 %v256
  %334 = vmatpush.bf16.msra.mxu0 %v255
  %335 = vmatpush.bf16.msra.mxu0 %v254
  %336 = vmatmul.bf16.gmra.mxu0 %v104
  %v337 = vpop.f32.mrf.mxu0
  %v338 = vadd.f32 %v325, %v337
  %v339 = vpop.f32.mrf.mxu0
  %340 = vdwg.mxu0
  %341 = vmatpush.bf16.msra.mxu0 %v269
  %342 = vmatpush.bf16.msra.mxu0 %v268
  %343 = vmatpush.bf16.msra.mxu0 %v267
  %344 = vmatpush.bf16.msra.mxu0 %v266
  %345 = vmatpush.bf16.msra.mxu0 %v265
  %346 = vmatpush.bf16.msra.mxu0 %v264
  %347 = vmatpush.bf16.msra.mxu0 %v263
  %348 = vmatpush.bf16.msra.mxu0 %v262
  %349 = vmatmul.bf16.gmra.mxu0 %v105
  %v350 = vpop.f32.mrf.mxu0
  %v351 = vadd.f32 %v338, %v350
  %v352 = vpop.f32.mrf.mxu0
  %353 = vdwg.mxu0
  %v354 = vtanh.pop %v351
  %v355 = vpack.c.bf16 %v354, %v354
  %v356 = vld [vmem:[%s3] sm:$0xf]
  %v357 = vld [vmem:[%s3 + $0x4] sm:$0xf]
  %v358 = vld [vmem:[%s3 + $0x8] sm:$0xf]
  %v359 = vld [vmem:[%s3 + $0xc] sm:$0xf]
  %v360 = vld [vmem:[%s3 + $0x10] sm:$0xf]
  %v361 = vld [vmem:[%s3 + $0x14] sm:$0xf]
  %v362 = vld [vmem:[%s3 + $0x18] sm:$0xf]
  %v363 = vld [vmem:[%s3 + $0x1c] sm:$0xf]
  %v364 = vld [vmem:[%s3 + $0x20] sm:$0xf]
  %v365 = vld [vmem:[%s3 + $0x24] sm:$0xf]
  %v366 = vld [vmem:[%s3 + $0x28] sm:$0xf]
  %v367 = vld [vmem:[%s3 + $0x2c] sm:$0xf]
  %v368 = vld [vmem:[%s3 + $0x30] sm:$0xf]
  %v369 = vld [vmem:[%s3 + $0x34] sm:$0xf]
  %v370 = vld [vmem:[%s3 + $0x38] sm:$0xf]
  %v371 = vld [vmem:[%s3 + $0x3c] sm:$0xf]
  %v372 = vld [vmem:[%s4] sm:$0x1]
  %v374 = vperm.slane %v372, 0
  %v392 = vunpack.c.l.b16 %v356
  %v393 = vunpack.c.l.b16 %v357
  %v394 = vunpack.c.l.b16 %v358
  %v395 = vunpack.c.l.b16 %v359
  %v396 = vunpack.c.l.b16 %v360
  %v397 = vunpack.c.l.b16 %v361
  %v398 = vunpack.c.l.b16 %v362
  %v399 = vunpack.c.l.b16 %v363
  %v400 = vunpack.c.l.b16 %v364
  %v401 = vunpack.c.l.b16 %v365
  %v402 = vunpack.c.l.b16 %v366
  %v403 = vunpack.c.l.b16 %v367
  %v404 = vunpack.c.l.b16 %v368
  %v405 = vunpack.c.l.b16 %v369
  %v406 = vunpack.c.l.b16 %v370
  %v407 = vunpack.c.l.b16 %v371
  %v408 = vpack.c.b16 %v393, %v392
  %v409 = vpack.c.b16 %v395, %v394
  %v410 = vpack.c.b16 %v397, %v396
  %v411 = vpack.c.b16 %v399, %v398
  %v412 = vpack.c.b16 %v401, %v400
  %v413 = vpack.c.b16 %v403, %v402
  %v414 = vpack.c.b16 %v405, %v404
  %v415 = vpack.c.b16 %v407, %v406
  %424 = vmatpush.bf16.msra.mxu0 %v415
  %425 = vmatpush.bf16.msra.mxu0 %v414
  %426 = vmatpush.bf16.msra.mxu0 %v413
  %427 = vmatpush.bf16.msra.mxu0 %v412
  %428 = vmatpush.bf16.msra.mxu0 %v411
  %429 = vmatpush.bf16.msra.mxu0 %v410
  %430 = vmatpush.bf16.msra.mxu0 %v409
  %431 = vmatpush.bf16.msra.mxu0 %v408
  %432 = vmatmul.bf16.gmra.mxu0 %v355
  %v433 = vpop.f32.mrf.mxu0
  %v434 = vadd.f32 %v374, %v433
  %v435 = vpop.f32.mrf.mxu0
  %436 = vdwg.mxu0
  %v437 = vtanh.pop %v434
  %v438 = vpack.c.bf16 %v437, %v437
  %v439 = vld [vmem:[%s5] sm:$0xf]
  %v440 = vld [vmem:[%s5 + $0x4] sm:$0xf]
  %v441 = vld [vmem:[%s5 + $0x8] sm:$0xf]
  %v442 = vld [vmem:[%s5 + $0xc] sm:$0xf]
  %v443 = vld [vmem:[%s5 + $0x10] sm:$0xf]
  %v444 = vld [vmem:[%s5 + $0x14] sm:$0xf]
  %v445 = vld [vmem:[%s5 + $0x18] sm:$0xf]
  %v446 = vld [vmem:[%s5 + $0x1c] sm:$0xf]
  %v447 = vld [vmem:[%s5 + $0x20] sm:$0xf]
  %v448 = vld [vmem:[%s5 + $0x24] sm:$0xf]
  %v449 = vld [vmem:[%s5 + $0x28] sm:$0xf]
  %v450 = vld [vmem:[%s5 + $0x2c] sm:$0xf]
  %v451 = vld [vmem:[%s5 + $0x30] sm:$0xf]
  %v452 = vld [vmem:[%s5 + $0x34] sm:$0xf]
  %v453 = vld [vmem:[%s5 + $0x38] sm:$0xf]
  %v454 = vld [vmem:[%s5 + $0x3c] sm:$0xf]
  %v455 = vld [vmem:[%s6] sm:$0x1]
  %v457 = vperm.slane %v455, 0
  %v475 = vunpack.c.l.b16 %v439
  %v476 = vunpack.c.l.b16 %v440
  %v477 = vunpack.c.l.b16 %v441
  %v478 = vunpack.c.l.b16 %v442
  %v479 = vunpack.c.l.b16 %v443
  %v480 = vunpack.c.l.b16 %v444
  %v481 = vunpack.c.l.b16 %v445
  %v482 = vunpack.c.l.b16 %v446
  %v483 = vunpack.c.l.b16 %v447
  %v484 = vunpack.c.l.b16 %v448
  %v485 = vunpack.c.l.b16 %v449
  %v486 = vunpack.c.l.b16 %v450
  %v487 = vunpack.c.l.b16 %v451
  %v488 = vunpack.c.l.b16 %v452
  %v489 = vunpack.c.l.b16 %v453
  %v490 = vunpack.c.l.b16 %v454
  %v491 = vpack.c.b16 %v476, %v475
  %v492 = vpack.c.b16 %v478, %v477
  %v493 = vpack.c.b16 %v480, %v479
  %v494 = vpack.c.b16 %v482, %v481
  %v495 = vpack.c.b16 %v484, %v483
  %v496 = vpack.c.b16 %v486, %v485
  %v497 = vpack.c.b16 %v488, %v487
  %v498 = vpack.c.b16 %v490, %v489
  %507 = vmatpush.bf16.msra.mxu0 %v498
  %508 = vmatpush.bf16.msra.mxu0 %v497
  %509 = vmatpush.bf16.msra.mxu0 %v496
  %510 = vmatpush.bf16.msra.mxu0 %v495
  %511 = vmatpush.bf16.msra.mxu0 %v494
  %512 = vmatpush.bf16.msra.mxu0 %v493
  %513 = vmatpush.bf16.msra.mxu0 %v492
  %514 = vmatpush.bf16.msra.mxu0 %v491
  %515 = vmatmul.bf16.gmra.mxu0 %v438
  %v516 = vpop.f32.mrf.mxu0
  %v517 = vadd.f32 %v457, %v516
  %v518 = vpop.f32.mrf.mxu0
  %519 = vdwg.mxu0
  %520 = vst [vmem:[%s7] sm:$0xff] %v517
  // Predicated region
  $region30: #{lenet_tanh_forward.5} parent=0 // pred_check
    _
  $region31: #{lenet_tanh_forward.5} parent=0 // pred_check_branch
    %522 = sbr.rel (0) target = $region33
  $region32: #{lenet_tanh_forward.5} parent=0 // pred_region
    _
  $region33: #{lenet_tanh_forward.5} parent=0 // pred_fallthru
    _
  // Predicated region
  $region34: #{lenet_tanh_forward.5} parent=0 // pred_check
    _
  $region35: #{lenet_tanh_forward.5} parent=0 // pred_check_branch
    %524 = sbr.rel (0) target = $region37
  $region36: #{lenet_tanh_forward.5} parent=0 // pred_region
    _
  $region37: #{lenet_tanh_forward.5} parent=0 // pred_fallthru
    _

</llo_original>
